<compile_context>
chip_gen: v5e
topology: v5e:2x2
jax: 0.10.0
libtpu: 0.0.40
codegen_flags: <defaults>
</compile_context>

<pallas_src>
import math

import jax
import jax.numpy as jnp
from jax.experimental import pallas as pl
from jax.experimental.pallas import tpu as pltpu

_LANES = 128
_SUBLANES = 8
_ROW_ALIGN = 16                        # covers bf16 sublane packing too
_CHUNK_ROWS = 512                      # <=64 f32 vregs per input per chunk
_MAX_TILE_ROWS_1IN = 16384             # 8 MiB block -> 16 MiB double-buffered
_MAX_TILE_ROWS_2IN = 8192              # 4 MiB block -> 16 MiB double-buffered (2 inputs)
_VMEM_LIMIT_BYTES = 32 * 1024 * 1024   # raise v5e's 16 MiB scoped default; safe on v6e/v7x
_FAST_PATH_ELEMS = 256 * 1024          # < ~1 MiB of data: plain XLA beats a kernel launch


def _round_up(x, m):
    return -(-x // m) * m


def _num_tensorcores():
    """2 on megacore-style chips (v4 / v5p / v7x), else 1."""
    try:
        kind = jax.devices()[0].device_kind.lower()
    except Exception:
        return 1
    if ("v4" in kind) or ("v5p" in kind) or ("v7" in kind) or ("7x" in kind):
        return 2
    return 1


def _plan(n_elems, n_inputs):
    """Pick (num_splits, tiles_per_core, tile_rows, chunk_rows, padded_rows)."""
    rows = -(-n_elems // _LANES)
    num_splits = _num_tensorcores()
    max_tile = _MAX_TILE_ROWS_1IN if n_inputs == 1 else _MAX_TILE_ROWS_2IN
    total_tiles = max(1, -(-rows // max_tile))
    total_tiles = _round_up(total_tiles, num_splits)
    tile_rows = _round_up(-(-rows // total_tiles), _ROW_ALIGN)
    # Split the tile into equal chunks (each a multiple of 16 rows) so the
    # in-kernel fold loop has a static, exact trip count.
    n_chunks = max(1, -(-tile_rows // _CHUNK_ROWS))
    chunk_rows = _round_up(-(-tile_rows // n_chunks), _ROW_ALIGN)
    tile_rows = chunk_rows * n_chunks
    tiles_per_core = total_tiles // num_splits
    padded_rows = tile_rows * total_tiles
    return num_splits, tiles_per_core, tile_rows, chunk_rows, padded_rows


def _to_slab(a, pad_value, padded_rows):
    """Flatten to a lane-dense (padded_rows, 128) slab in the SOURCE dtype.

    Only the padding tail is written; aligned sizes are a copy-free reshape.
    The pad value is reduction-neutral for the op applied in the kernel."""
    flat = jnp.reshape(a, (-1,))
    total = padded_rows * _LANES
    if total != flat.shape[0]:
        flat = jnp.pad(flat, (0, total - flat.shape[0]), constant_values=pad_value)
    return flat.reshape(padded_rows, _LANES)


# ----------------------------------------------------------------------------
# Generic tiled reduction: sum over all elements of partial_fn(*inputs).
# ----------------------------------------------------------------------------
def _make_reduce_kernel(partial_fn, n_in, tile_rows, chunk_rows):
    n_chunks = tile_rows // chunk_rows
    folds = chunk_rows // _SUBLANES

    def kernel(*refs):
        in_refs = refs[:n_in]
        o_ref = refs[n_in]                        # (8, 128) lane-dense accumulator

        @pl.when(pl.program_id(1) == 0)
        def _init():
            o_ref[...] = jnp.zeros_like(o_ref)

        # Chunked fold: bounds the live vreg set (<= 64 f32 vregs per input);
        # elementwise op on (chunk,128), then per-vreg VPU fold to (8,128).
        part = jnp.zeros((_SUBLANES, _LANES), jnp.float32)
        for c in range(n_chunks):
            sl = slice(c * chunk_rows, (c + 1) * chunk_rows)     # static view
            vals = partial_fn(*[r[sl, :] for r in in_refs])      # f32 (chunk,128)
            part = part + jnp.sum(vals.reshape(folds, _SUBLANES, _LANES), axis=0)
        o_ref[...] += part

    return kernel


def _lane_reduce(partial_fn, arrays, pad_values):
    """sum(partial_fn(*arrays)) over all elements via a tiled lane-dense kernel."""
    num_splits, tiles_per_core, tile_rows, chunk_rows, padded_rows = _plan(
        arrays[0].size, len(arrays))
    slabs = [_to_slab(a, pv, padded_rows) for a, pv in zip(arrays, pad_values)]

    kernel = _make_reduce_kernel(partial_fn, len(slabs), tile_rows, chunk_rows)

    def in_map(c, i):
        return (c * tiles_per_core + i, 0)

    partials = pl.pallas_call(
        kernel,
        out_shape=jax.ShapeDtypeStruct((num_splits, _SUBLANES, _LANES), jnp.float32),
        grid_spec=pltpu.PrefetchScalarGridSpec(
            num_scalar_prefetch=0,
            grid=(num_splits, tiles_per_core),
            in_specs=[pl.BlockSpec((tile_rows, _LANES), in_map) for _ in slabs],
            out_specs=pl.BlockSpec((None, _SUBLANES, _LANES),
                                   lambda c, i: (c, 0, 0)),
        ),
        compiler_params=pltpu.CompilerParams(
            dimension_semantics=("parallel", "arbitrary"),
            vmem_limit_bytes=_VMEM_LIMIT_BYTES),
    )(*slabs)
    # Single cross-lane/sublane reduction of the tiny (splits, 8, 128) partials.
    return jnp.sum(partials)


# ----------------------------------------------------------------------------
# The two reductions needed by RateDistortionLoss.
# ----------------------------------------------------------------------------
def _log_f32(x):
    return jnp.log(x.astype(jnp.float32))


def _sq_err_f32(a, b):
    d = jnp.clip(a.astype(jnp.float32), 0.0, 1.0) - b.astype(jnp.float32)
    return d * d


def sum_log_all(likelihood_list):
    """sum(log(x)) over ALL likelihood tensors (one launch per large tensor)."""
    total = jnp.float32(0.0)
    for x in likelihood_list:
        if x.size < _FAST_PATH_ELEMS:
            total = total + jnp.sum(jnp.log(x.astype(jnp.float32)))
        else:
            total = total + _lane_reduce(_log_f32, [x], [1.0])   # log(1) == 0
    return total


def clamped_sse(x_hat, target):
    """sum((clamp(x_hat, 0, 1) - target)^2)."""
    if x_hat.size < _FAST_PATH_ELEMS:
        return jnp.sum(_sq_err_f32(x_hat, target))
    return _lane_reduce(_sq_err_f32, [x_hat, target], [0.0, 0.0])


# ----------------------------------------------------------------------------
# RateDistortionLoss.forward
# ----------------------------------------------------------------------------
def rate_distortion_loss(output, target):
    """output = {'likelihoods': {name: array}, 'x_hat': array or None}
    target: (N, C, H, W) float, values in [0, 1]."""
    N, _, H, W = target.shape
    num_pixels = N * H * W

    out = {}
    likelihoods = list(output['likelihoods'].values())
    out['bpp_loss'] = sum_log_all(likelihoods) / (-math.log(2) * num_pixels)

    if output['x_hat'] is not None:
        x_hat = output['x_hat']
        sse = clamped_sse(x_hat, target)
        mse = sse / float(x_hat.size)            # == nn.MSELoss() (mean reduction)
        out['mse_loss'] = mse
        # psnr(): if mse == 0 -> 100 else 10*log10(1/mse)
        out['psnr'] = jnp.where(mse == 0.0, jnp.float32(100.0),
                                10.0 * jnp.log10(1.0 / mse))
    return out


if __name__ == "__main__":
    def reference(output, target):
        N, _, H, W = target.shape
        num_pixels = N * H * W
        ref_bpp = sum(jnp.sum(jnp.log(l)) / (-math.log(2) * num_pixels)
                      for l in output['likelihoods'].values())
        ref_mse = jnp.mean((jnp.clip(output['x_hat'], 0.0, 1.0) - target) ** 2)
        ref_psnr = jnp.where(ref_mse == 0.0, jnp.float32(100.0),
                             10.0 * jnp.log10(1.0 / ref_mse))
        return ref_bpp, ref_mse, ref_psnr

    # ---- small case (module's typical toy shapes; exercises the fast path) ----
    k1, k2, k3, k4 = jax.random.split(jax.random.PRNGKey(0), 4)
    N, C, H, W = 2, 3, 16, 16
    target = jax.random.uniform(k1, (N, C, H, W), jnp.float32, 0.0, 1.0)
    x_hat = jax.random.uniform(k2, (N, C, H, W), jnp.float32, -0.2, 1.2)
    likelihoods = {
        'y': jax.random.uniform(k3, (N, 8, 8, 8), jnp.float32, 0.01, 1.0),
        'z': jax.random.uniform(k4, (N, 8, 4, 4), jnp.float32, 0.01, 1.0),
    }
    output = {'likelihoods': likelihoods, 'x_hat': x_hat}
    res = rate_distortion_loss(output, target)
    jax.block_until_ready(res)
    rb, rm, rp = reference(output, target)
    assert jnp.allclose(res['bpp_loss'], rb, rtol=1e-5, atol=1e-5)
    assert jnp.allclose(res['mse_loss'], rm, rtol=1e-5, atol=1e-6)
    assert jnp.allclose(res['psnr'], rp, rtol=1e-5, atol=1e-4)

    # ---- larger case: exercises the Pallas kernels (multi-tile grid, chunked
    #      fold, neutral padding of ragged tails, 1-input and 2-input paths,
    #      plus one fast-path likelihood) ----
    k5, k6, k7, k8 = jax.random.split(jax.random.PRNGKey(1), 4)
    N, C, H, W = 2, 3, 500, 500
    target2 = jax.random.uniform(k5, (N, C, H, W), jnp.float32, 0.0, 1.0)
    x_hat2 = jax.random.uniform(k6, (N, C, H, W), jnp.float32, -0.2, 1.2)
    lk2 = {
        'y': jax.random.uniform(k7, (N, 181, 33, 33), jnp.float32, 0.01, 1.0),
        'z': jax.random.uniform(k8, (N, 192, 8, 8), jnp.float32, 0.01, 1.0),
    }
    output2 = {'likelihoods': lk2, 'x_hat': x_hat2}
    res2 = rate_distortion_loss(output2, target2)
    jax.block_until_ready(res2)
    rb2, rm2, rp2 = reference(output2, target2)
    assert jnp.allclose(res2['bpp_loss'], rb2, rtol=2e-4, atol=1e-4)
    assert jnp.allclose(res2['mse_loss'], rm2, rtol=2e-4, atol=1e-6)
    assert jnp.allclose(res2['psnr'], rp2, rtol=2e-4, atol=1e-3)

    print("KERNEL_OK")
</pallas_src>

<mosaic_0001>
module attributes {stable_mosaic.version = 11 : i64} {
  func.func @kernel(%arg0: i32, %arg1: i32, %arg2: memref<3136x128xf32, #tpu.memory_space<vmem>>, %arg3: memref<1x8x128xf32, #tpu.memory_space<vmem>>) attributes {dimension_semantics = [#tpu.dimension_semantics<parallel>, #tpu.dimension_semantics<arbitrary>], iteration_bounds = array<i64: 1, 1>, scalar_prefetch = 0 : i64, scratch_operands = 0 : i64, tpu.core_type = #tpu.core_type<tc>, window_params = [{transform_indices = @transform_0, window_bounds = array<i64: 3136, 128>}, {transform_indices = @transform_1, window_bounds = array<i64: 1, 8, 128>}]} {
    %c0_i32 = arith.constant 0 : i32
    %0 = arith.cmpi eq, %arg1, %c0_i32 : i32
    %1 = arith.extui %0 : i1 to i32
    %c0_i32_0 = arith.constant 0 : i32
    %2 = arith.cmpi ne, %1, %c0_i32_0 : i32
    scf.if %2 {
      %cst_21 = arith.constant 0.000000e+00 : f32
      %45 = vector.broadcast %cst_21 : f32 to vector<8x128xf32>
      %c0_22 = arith.constant 0 : index
      %c0_23 = arith.constant 0 : index
      %c0_24 = arith.constant 0 : index
      %46 = vector.load %arg3[%c0_22, %c0_23, %c0_24] : memref<1x8x128xf32, #tpu.memory_space<vmem>>, vector<1x8x128xf32>
      %47 = vector.shape_cast %46 : vector<1x8x128xf32> to vector<8x128xf32>
      %48 = vector.shape_cast %45 : vector<8x128xf32> to vector<1x8x128xf32>
      tpu.vector_store %arg3[%c0_22, %c0_23, %c0_24], %48 {strides = array<i32>} : memref<1x8x128xf32, #tpu.memory_space<vmem>>, vector<1x8x128xf32>,
    } else {
    }
    %cst = arith.constant 0.000000e+00 : f32
    %3 = vector.broadcast %cst : f32 to vector<8x128xf32>
    %c0 = arith.constant 0 : index
    %c0_1 = arith.constant 0 : index
    %4 = vector.load %arg2[%c0, %c0_1] : memref<3136x128xf32, #tpu.memory_space<vmem>>, vector<448x128xf32>
    %5 = math.log %4 : vector<448x128xf32>
    %6 = vector.shape_cast %5 : vector<448x128xf32> to vector<56x8x128xf32>
    %cst_2 = arith.constant dense<0.000000e+00> : vector<8x128xf32>
    %7 = vector.multi_reduction <add>, %6, %cst_2 [0] : vector<56x8x128xf32> to vector<8x128xf32>
    %8 = arith.addf %3, %7 : vector<8x128xf32>
    %c448 = arith.constant 448 : index
    %c0_3 = arith.constant 0 : index
    %9 = vector.load %arg2[%c448, %c0_3] : memref<3136x128xf32, #tpu.memory_space<vmem>>, vector<448x128xf32>
    %10 = math.log %9 : vector<448x128xf32>
    %11 = vector.shape_cast %10 : vector<448x128xf32> to vector<56x8x128xf32>
    %cst_4 = arith.constant dense<0.000000e+00> : vector<8x128xf32>
    %12 = vector.multi_reduction <add>, %11, %cst_4 [0] : vector<56x8x128xf32> to vector<8x128xf32>
    %13 = arith.addf %8, %12 : vector<8x128xf32>
    %c896 = arith.constant 896 : index
    %c0_5 = arith.constant 0 : index
    %14 = vector.load %arg2[%c896, %c0_5] : memref<3136x128xf32, #tpu.memory_space<vmem>>, vector<448x128xf32>
    %15 = math.log %14 : vector<448x128xf32>
    %16 = vector.shape_cast %15 : vector<448x128xf32> to vector<56x8x128xf32>
    %cst_6 = arith.constant dense<0.000000e+00> : vector<8x128xf32>
    %17 = vector.multi_reduction <add>, %16, %cst_6 [0] : vector<56x8x128xf32> to vector<8x128xf32>
    %18 = arith.addf %13, %17 : vector<8x128xf32>
    %c1344 = arith.constant 1344 : index
    %c0_7 = arith.constant 0 : index
    %19 = vector.load %arg2[%c1344, %c0_7] : memref<3136x128xf32, #tpu.memory_space<vmem>>, vector<448x128xf32>
    %20 = math.log %19 : vector<448x128xf32>
    %21 = vector.shape_cast %20 : vector<448x128xf32> to vector<56x8x128xf32>
    %cst_8 = arith.constant dense<0.000000e+00> : vector<8x128xf32>
    %22 = vector.multi_reduction <add>, %21, %cst_8 [0] : vector<56x8x128xf32> to vector<8x128xf32>
    %23 = arith.addf %18, %22 : vector<8x128xf32>
    %c1792 = arith.constant 1792 : index
    %c0_9 = arith.constant 0 : index
    %24 = vector.load %arg2[%c1792, %c0_9] : memref<3136x128xf32, #tpu.memory_space<vmem>>, vector<448x128xf32>
    %25 = math.log %24 : vector<448x128xf32>
    %26 = vector.shape_cast %25 : vector<448x128xf32> to vector<56x8x128xf32>
    %cst_10 = arith.constant dense<0.000000e+00> : vector<8x128xf32>
    %27 = vector.multi_reduction <add>, %26, %cst_10 [0] : vector<56x8x128xf32> to vector<8x128xf32>
    %28 = arith.addf %23, %27 : vector<8x128xf32>
    %c2240 = arith.constant 2240 : index
    %c0_11 = arith.constant 0 : index
    %29 = vector.load %arg2[%c2240, %c0_11] : memref<3136x128xf32, #tpu.memory_space<vmem>>, vector<448x128xf32>
    %30 = math.log %29 : vector<448x128xf32>
    %31 = vector.shape_cast %30 : vector<448x128xf32> to vector<56x8x128xf32>
    %cst_12 = arith.constant dense<0.000000e+00> : vector<8x128xf32>
    %32 = vector.multi_reduction <add>, %31, %cst_12 [0] : vector<56x8x128xf32> to vector<8x128xf32>
    %33 = arith.addf %28, %32 : vector<8x128xf32>
    %c2688 = arith.constant 2688 : index
    %c0_13 = arith.constant 0 : index
    %34 = vector.load %arg2[%c2688, %c0_13] : memref<3136x128xf32, #tpu.memory_space<vmem>>, vector<448x128xf32>
    %35 = math.log %34 : vector<448x128xf32>
    %36 = vector.shape_cast %35 : vector<448x128xf32> to vector<56x8x128xf32>
    %cst_14 = arith.constant dense<0.000000e+00> : vector<8x128xf32>
    %37 = vector.multi_reduction <add>, %36, %cst_14 [0] : vector<56x8x128xf32> to vector<8x128xf32>
    %38 = arith.addf %33, %37 : vector<8x128xf32>
    %c0_15 = arith.constant 0 : index
    %c0_16 = arith.constant 0 : index
    %c0_17 = arith.constant 0 : index
    %39 = vector.load %arg3[%c0_15, %c0_16, %c0_17] : memref<1x8x128xf32, #tpu.memory_space<vmem>>, vector<1x8x128xf32>
    %40 = vector.shape_cast %39 : vector<1x8x128xf32> to vector<8x128xf32>
    %41 = arith.addf %40, %38 : vector<8x128xf32>
    %c0_18 = arith.constant 0 : index
    %c0_19 = arith.constant 0 : index
    %c0_20 = arith.constant 0 : index
    %42 = vector.load %arg3[%c0_18, %c0_19, %c0_20] : memref<1x8x128xf32, #tpu.memory_space<vmem>>, vector<1x8x128xf32>
    %43 = vector.shape_cast %42 : vector<1x8x128xf32> to vector<8x128xf32>
    %44 = vector.shape_cast %41 : vector<8x128xf32> to vector<1x8x128xf32>
    tpu.vector_store %arg3[%c0_18, %c0_19, %c0_20], %44 {strides = array<i32>} : memref<1x8x128xf32, #tpu.memory_space<vmem>>, vector<1x8x128xf32>,
    return
  }
  func.func @transform_0(%arg0: i32, %arg1: i32) -> (i32, i32) {
    %c1_i32 = arith.constant 1 : i32
    %0 = arith.muli %arg0, %c1_i32 : i32
    %1 = arith.addi %0, %arg1 : i32
    %c0_i32 = arith.constant 0 : i32
    %c0_i32_0 = arith.constant 0 : i32
    return %1, %c0_i32 : i32, i32
  }
  func.func @transform_1(%arg0: i32, %arg1: i32) -> (i32, i32, i32) {
    %c0_i32 = arith.constant 0 : i32
    %c0_i32_0 = arith.constant 0 : i32
    %c0_i32_1 = arith.constant 0 : i32
    return %arg0, %c0_i32, %c0_i32_0 : i32, i32, i32
  }
}

</mosaic_0001>

<llo_original>
// kernel: tpu_custom_call.1
$region0: #{tpu_custom_call.1}
  #allocation0 [shape = 'u32[]', space=smem, size = 0x4, offset = 0x4, fixed_abs, tag = 'smem constant byte address 0x4 - core index']
  #allocation1 [shape = 'u32[72,128]{1,0:T(1,128)}', space=vmem, size = 0x9000, scoped, tag = 'internal scratch']
  %s0 = inlined_call_operand.hbm [shape: f32[3136,128], index: 0, kind: input, shape index: {}]
  %s1 = inlined_call_operand.hbm [shape: f32[1,8,128], index: 1, kind: output, shape index: {}]
  %s2 = sld [smem:[#allocation0]]
  $region22: #{tpu_custom_call.1} parent=0
    _
  %s4 = ssub.s32 1, %s2
  %s5 = scalar_select 0, %s4, %s2
  $region1: #{tpu_custom_call.1} parent=0
    #allocation2 [shape = 'u8[1605632]{0}', space=vmem, size = 0x188000, scoped, tag = 'input window, operand 0, single buffered']
    #allocation3 [shape = 's32[1]{0}', space=sflag, size = 0x4, scoped, tag = 'scoped memory for tpu_custom_call.1']
    #allocation4 [shape = 's32[1]{0}', space=sflag, size = 0x4, scoped, tag = 'scoped memory for tpu_custom_call.1']
    #allocation5 [shape = 'u8[4096]{0}', space=vmem, size = 0x1000, scoped, tag = 'output window, operand 0, single buffered']
    %6 = vsyncpa [#allocation3], 0
    %7 = vsyncpa [#allocation4], 0
    // Predicated region
    $region2: #{tpu_custom_call.1} parent=1 // pred_check
      _
    $region3: #{tpu_custom_call.1} parent=1 // pred_check_branch
      %9 = sbr.rel (0) target = $region5
    $region4: #{tpu_custom_call.1} parent=1 // pred_region
      %s10 = sadd.s32 0, 0
      %s11 = smul.u32 392, %s10
      %13 = vsyncadd [#allocation3], 0
      %s14 = smul.addr %s11, 8
      %s15 = scalar_lea.hbm %s0, %s14
      %s16 = sshll.u32 %s15, 4
      %s17 = int_to_ptr.hbm [resolvable:$true] %s16
      %s18 = sshll.u32 [#allocation2], 4
      %s19 = int_to_ptr.vmem [resolvable:$true] %s18
      %24 = dma.hbm_to_vmem [thread:$0]  %s17, 50176, %s19, [#allocation3], 128, 128, 8
    $region5: #{tpu_custom_call.1} parent=1 // pred_fallthru
      _
    // Predicated region
    $region6: #{tpu_custom_call.1} parent=1 // pred_check
      _
    $region7: #{tpu_custom_call.1} parent=1 // pred_check_branch
      %26 = sbr.rel (0) target = $region9
    $region8: #{tpu_custom_call.1} parent=1 // pred_region
      %28 = dma.done [#allocation3], 50176
    $region9: #{tpu_custom_call.1} parent=1 // pred_fallthru
      _
    %s29 = sadd.s32 0, 0
    %s30 = smul.u32 392, %s29
    %p31 = scmp.eq.s32.totalorder 0, 0
    // Predicated region
    $region10: #{tpu_custom_call.1} parent=1 // pred_check
      %p32 = pneg %p31
    $region11: #{tpu_custom_call.1} parent=1 // pred_check_branch
      %34 = sbr.rel (%p32) target = $region13
    $region12: #{tpu_custom_call.1} parent=1 // pred_region
      %35 = vst [vmem:[#allocation5] sm:$0xff] 0.0
    $region13: #{tpu_custom_call.1} parent=1 // pred_fallthru
      _
    %v36 = vld [vmem:[#allocation2] sm:$0xff]
    %v37 = vld [vmem:[#allocation2 + $0x8] sm:$0xff]
    %v38 = vld [vmem:[#allocation2 + $0x10] sm:$0xff]
    %v39 = vld [vmem:[#allocation2 + $0x18] sm:$0xff]
    %v40 = vld [vmem:[#allocation2 + $0x20] sm:$0xff]
    %v41 = vld [vmem:[#allocation2 + $0x28] sm:$0xff]
    %v42 = vld [vmem:[#allocation2 + $0x30] sm:$0xff]
    %v43 = vld [vmem:[#allocation2 + $0x38] sm:$0xff]
    %v44 = vld [vmem:[#allocation2 + $0x40] sm:$0xff]
    %v45 = vld [vmem:[#allocation2 + $0x48] sm:$0xff]
    %v46 = vld [vmem:[#allocation2 + $0x50] sm:$0xff]
    %v47 = vld [vmem:[#allocation2 + $0x58] sm:$0xff]
    %v48 = vld [vmem:[#allocation2 + $0x60] sm:$0xff]
    %v49 = vld [vmem:[#allocation2 + $0x68] sm:$0xff]
    %v50 = vld [vmem:[#allocation2 + $0x70] sm:$0xff]
    %v51 = vld [vmem:[#allocation2 + $0x78] sm:$0xff]
    %v52 = vld [vmem:[#allocation2 + $0x80] sm:$0xff]
    %v53 = vld [vmem:[#allocation2 + $0x88] sm:$0xff]
    %v54 = vld [vmem:[#allocation2 + $0x90] sm:$0xff]
    %v55 = vld [vmem:[#allocation2 + $0x98] sm:$0xff]
    %v56 = vld [vmem:[#allocation2 + $0xa0] sm:$0xff]
    %v57 = vld [vmem:[#allocation2 + $0xa8] sm:$0xff]
    %v58 = vld [vmem:[#allocation2 + $0xb0] sm:$0xff]
    %v59 = vld [vmem:[#allocation2 + $0xb8] sm:$0xff]
    %v60 = vld [vmem:[#allocation2 + $0xc0] sm:$0xff]
    %v61 = vld [vmem:[#allocation2 + $0xc8] sm:$0xff]
    %v62 = vld [vmem:[#allocation2 + $0xd0] sm:$0xff]
    %v63 = vld [vmem:[#allocation2 + $0xd8] sm:$0xff]
    %v64 = vld [vmem:[#allocation2 + $0xe0] sm:$0xff]
    %v65 = vld [vmem:[#allocation2 + $0xe8] sm:$0xff]
    %v66 = vld [vmem:[#allocation2 + $0xf0] sm:$0xff]
    %v67 = vld [vmem:[#allocation2 + $0xf8] sm:$0xff]
    %v68 = vld [vmem:[#allocation2 + $0x100] sm:$0xff]
    %v69 = vld [vmem:[#allocation2 + $0x108] sm:$0xff]
    %v70 = vld [vmem:[#allocation2 + $0x110] sm:$0xff]
    %v71 = vld [vmem:[#allocation2 + $0x118] sm:$0xff]
    %v72 = vld [vmem:[#allocation2 + $0x120] sm:$0xff]
    %v73 = vld [vmem:[#allocation2 + $0x128] sm:$0xff]
    %v74 = vld [vmem:[#allocation2 + $0x130] sm:$0xff]
    %v75 = vld [vmem:[#allocation2 + $0x138] sm:$0xff]
    %v76 = vld [vmem:[#allocation2 + $0x140] sm:$0xff]
    %v77 = vld [vmem:[#allocation2 + $0x148] sm:$0xff]
    %v78 = vld [vmem:[#allocation2 + $0x150] sm:$0xff]
    %v79 = vld [vmem:[#allocation2 + $0x158] sm:$0xff]
    %v80 = vld [vmem:[#allocation2 + $0x160] sm:$0xff]
    %v81 = vld [vmem:[#allocation2 + $0x168] sm:$0xff]
    %v82 = vld [vmem:[#allocation2 + $0x170] sm:$0xff]
    %v83 = vld [vmem:[#allocation2 + $0x178] sm:$0xff]
    %v84 = vld [vmem:[#allocation2 + $0x180] sm:$0xff]
    %v85 = vld [vmem:[#allocation2 + $0x188] sm:$0xff]
    %v86 = vld [vmem:[#allocation2 + $0x190] sm:$0xff]
    %v87 = vld [vmem:[#allocation2 + $0x198] sm:$0xff]
    %v88 = vld [vmem:[#allocation2 + $0x1a0] sm:$0xff]
    %v89 = vld [vmem:[#allocation2 + $0x1a8] sm:$0xff]
    %v90 = vld [vmem:[#allocation2 + $0x1b0] sm:$0xff]
    %v91 = vld [vmem:[#allocation2 + $0x1b8] sm:$0xff]
    %v92 = vlog2.pop %v36
    %v93 = vmul.f32 %v92, 0.6931472
    %v94 = vlog2.pop %v37
    %v95 = vmul.f32 %v94, 0.6931472
    %v96 = vlog2.pop %v38
    %v97 = vmul.f32 %v96, 0.6931472
    %v98 = vlog2.pop %v39
    %v99 = vmul.f32 %v98, 0.6931472
    %v100 = vlog2.pop %v40
    %v101 = vmul.f32 %v100, 0.6931472
    %v102 = vlog2.pop %v41
    %v103 = vmul.f32 %v102, 0.6931472
    %v104 = vlog2.pop %v42
    %v105 = vmul.f32 %v104, 0.6931472
    %v106 = vlog2.pop %v43
    %v107 = vmul.f32 %v106, 0.6931472
    %v108 = vlog2.pop %v44
    %v109 = vmul.f32 %v108, 0.6931472
    %v110 = vlog2.pop %v45
    %v111 = vmul.f32 %v110, 0.6931472
    %v112 = vlog2.pop %v46
    %v113 = vmul.f32 %v112, 0.6931472
    %v114 = vlog2.pop %v47
    %v115 = vmul.f32 %v114, 0.6931472
    %v116 = vlog2.pop %v48
    %v117 = vmul.f32 %v116, 0.6931472
    %v118 = vlog2.pop %v49
    %v119 = vmul.f32 %v118, 0.6931472
    %v120 = vlog2.pop %v50
    %v121 = vmul.f32 %v120, 0.6931472
    %v122 = vlog2.pop %v51
    %v123 = vmul.f32 %v122, 0.6931472
    %v124 = vlog2.pop %v52
    %v125 = vmul.f32 %v124, 0.6931472
    %v126 = vlog2.pop %v53
    %v127 = vmul.f32 %v126, 0.6931472
    %v128 = vlog2.pop %v54
    %v129 = vmul.f32 %v128, 0.6931472
    %v130 = vlog2.pop %v55
    %v131 = vmul.f32 %v130, 0.6931472
    %v132 = vlog2.pop %v56
    %v133 = vmul.f32 %v132, 0.6931472
    %v134 = vlog2.pop %v57
    %v135 = vmul.f32 %v134, 0.6931472
    %v136 = vlog2.pop %v58
    %v137 = vmul.f32 %v136, 0.6931472
    %v138 = vlog2.pop %v59
    %v139 = vmul.f32 %v138, 0.6931472
    %v140 = vlog2.pop %v60
    %v141 = vmul.f32 %v140, 0.6931472
    %v142 = vlog2.pop %v61
    %v143 = vmul.f32 %v142, 0.6931472
    %v144 = vlog2.pop %v62
    %v145 = vmul.f32 %v144, 0.6931472
    %v146 = vlog2.pop %v63
    %v147 = vmul.f32 %v146, 0.6931472
    %v148 = vlog2.pop %v64
    %v149 = vmul.f32 %v148, 0.6931472
    %v150 = vlog2.pop %v65
    %v151 = vmul.f32 %v150, 0.6931472
    %v152 = vlog2.pop %v66
    %v153 = vmul.f32 %v152, 0.6931472
    %v154 = vlog2.pop %v67
    %v155 = vmul.f32 %v154, 0.6931472
    %v156 = vlog2.pop %v68
    %v157 = vmul.f32 %v156, 0.6931472
    %v158 = vlog2.pop %v69
    %v159 = vmul.f32 %v158, 0.6931472
    %v160 = vlog2.pop %v70
    %v161 = vmul.f32 %v160, 0.6931472
    %v162 = vlog2.pop %v71
    %v163 = vmul.f32 %v162, 0.6931472
    %v164 = vlog2.pop %v72
    %v165 = vmul.f32 %v164, 0.6931472
    %v166 = vlog2.pop %v73
    %v167 = vmul.f32 %v166, 0.6931472
    %v168 = vlog2.pop %v74
    %v169 = vmul.f32 %v168, 0.6931472
    %v170 = vlog2.pop %v75
    %v171 = vmul.f32 %v170, 0.6931472
    %v172 = vlog2.pop %v76
    %v173 = vmul.f32 %v172, 0.6931472
    %v174 = vlog2.pop %v77
    %v175 = vmul.f32 %v174, 0.6931472
    %v176 = vlog2.pop %v78
    %v177 = vmul.f32 %v176, 0.6931472
    %v178 = vlog2.pop %v79
    %v179 = vmul.f32 %v178, 0.6931472
    %v180 = vlog2.pop %v80
    %v181 = vmul.f32 %v180, 0.6931472
    %v182 = vlog2.pop %v81
    %v183 = vmul.f32 %v182, 0.6931472
    %v184 = vlog2.pop %v82
    %v185 = vmul.f32 %v184, 0.6931472
    %v186 = vlog2.pop %v83
    %v187 = vmul.f32 %v186, 0.6931472
    %v188 = vlog2.pop %v84
    %v189 = vmul.f32 %v188, 0.6931472
    %v190 = vlog2.pop %v85
    %v191 = vmul.f32 %v190, 0.6931472
    %v192 = vlog2.pop %v86
    %v193 = vmul.f32 %v192, 0.6931472
    %v194 = vlog2.pop %v87
    %v195 = vmul.f32 %v194, 0.6931472
    %v196 = vlog2.pop %v88
    %v197 = vmul.f32 %v196, 0.6931472
    %v198 = vlog2.pop %v89
    %v199 = vmul.f32 %v198, 0.6931472
    %v200 = vlog2.pop %v90
    %v201 = vmul.f32 %v200, 0.6931472
    %v202 = vlog2.pop %v91
    %v203 = vmul.f32 %v202, 0.6931472
    %v204 = vadd.f32 %v93, %v95
    %v205 = vadd.f32 %v204, %v97
    %v206 = vadd.f32 %v205, %v99
    %v207 = vadd.f32 %v206, %v101
    %v208 = vadd.f32 %v207, %v103
    %v209 = vadd.f32 %v208, %v105
    %v210 = vadd.f32 %v209, %v107
    %v211 = vadd.f32 %v210, %v109
    %v212 = vadd.f32 %v211, %v111
    %v213 = vadd.f32 %v212, %v113
    %v214 = vadd.f32 %v213, %v115
    %v215 = vadd.f32 %v214, %v117
    %v216 = vadd.f32 %v215, %v119
    %v217 = vadd.f32 %v216, %v121
    %v218 = vadd.f32 %v217, %v123
    %v219 = vadd.f32 %v218, %v125
    %v220 = vadd.f32 %v219, %v127
    %v221 = vadd.f32 %v220, %v129
    %v222 = vadd.f32 %v221, %v131
    %v223 = vadd.f32 %v222, %v133
    %v224 = vadd.f32 %v223, %v135
    %v225 = vadd.f32 %v224, %v137
    %v226 = vadd.f32 %v225, %v139
    %v227 = vadd.f32 %v226, %v141
    %v228 = vadd.f32 %v227, %v143
    %v229 = vadd.f32 %v228, %v145
    %v230 = vadd.f32 %v229, %v147
    %v231 = vadd.f32 %v230, %v149
    %v232 = vadd.f32 %v231, %v151
    %v233 = vadd.f32 %v232, %v153
    %v234 = vadd.f32 %v233, %v155
    %v235 = vadd.f32 %v234, %v157
    %v236 = vadd.f32 %v235, %v159
    %v237 = vadd.f32 %v236, %v161
    %v238 = vadd.f32 %v237, %v163
    %v239 = vadd.f32 %v238, %v165
    %v240 = vadd.f32 %v239, %v167
    %v241 = vadd.f32 %v240, %v169
    %v242 = vadd.f32 %v241, %v171
    %v243 = vadd.f32 %v242, %v173
    %v244 = vadd.f32 %v243, %v175
    %v245 = vadd.f32 %v244, %v177
    %v246 = vadd.f32 %v245, %v179
    %v247 = vadd.f32 %v246, %v181
    %v248 = vadd.f32 %v247, %v183
    %v249 = vadd.f32 %v248, %v185
    %v250 = vadd.f32 %v249, %v187
    %v251 = vadd.f32 %v250, %v189
    %v252 = vadd.f32 %v251, %v191
    %v253 = vadd.f32 %v252, %v193
    %v254 = vadd.f32 %v253, %v195
    %v255 = vadd.f32 %v254, %v197
    %v256 = vadd.f32 %v255, %v199
    %v257 = vadd.f32 %v256, %v201
    %v258 = vadd.f32 %v257, %v203
    %v259 = vadd.f32 %v258, 0.0
    %v260 = vld [vmem:[#allocation2 + $0x1c0] sm:$0xff]
    %v261 = vld [vmem:[#allocation2 + $0x1c8] sm:$0xff]
    %v262 = vld [vmem:[#allocation2 + $0x1d0] sm:$0xff]
    %v263 = vld [vmem:[#allocation2 + $0x1d8] sm:$0xff]
    %v264 = vld [vmem:[#allocation2 + $0x1e0] sm:$0xff]
    %v265 = vld [vmem:[#allocation2 + $0x1e8] sm:$0xff]
    %v266 = vld [vmem:[#allocation2 + $0x1f0] sm:$0xff]
    %v267 = vld [vmem:[#allocation2 + $0x1f8] sm:$0xff]
    %v268 = vld [vmem:[#allocation2 + $0x200] sm:$0xff]
    %v269 = vld [vmem:[#allocation2 + $0x208] sm:$0xff]
    %v270 = vld [vmem:[#allocation2 + $0x210] sm:$0xff]
    %v271 = vld [vmem:[#allocation2 + $0x218] sm:$0xff]
    %v272 = vld [vmem:[#allocation2 + $0x220] sm:$0xff]
    %v273 = vld [vmem:[#allocation2 + $0x228] sm:$0xff]
    %v274 = vld [vmem:[#allocation2 + $0x230] sm:$0xff]
    %v275 = vld [vmem:[#allocation2 + $0x238] sm:$0xff]
    %v276 = vld [vmem:[#allocation2 + $0x240] sm:$0xff]
    %v277 = vld [vmem:[#allocation2 + $0x248] sm:$0xff]
    %v278 = vld [vmem:[#allocation2 + $0x250] sm:$0xff]
    %v279 = vld [vmem:[#allocation2 + $0x258] sm:$0xff]
    %v280 = vld [vmem:[#allocation2 + $0x260] sm:$0xff]
    %v281 = vld [vmem:[#allocation2 + $0x268] sm:$0xff]
    %v282 = vld [vmem:[#allocation2 + $0x270] sm:$0xff]
    %v283 = vld [vmem:[#allocation2 + $0x278] sm:$0xff]
    %v284 = vld [vmem:[#allocation2 + $0x280] sm:$0xff]
    %v285 = vld [vmem:[#allocation2 + $0x288] sm:$0xff]
    %v286 = vld [vmem:[#allocation2 + $0x290] sm:$0xff]
    %v287 = vld [vmem:[#allocation2 + $0x298] sm:$0xff]
    %v288 = vld [vmem:[#allocation2 + $0x2a0] sm:$0xff]
    %v289 = vld [vmem:[#allocation2 + $0x2a8] sm:$0xff]
    %v290 = vld [vmem:[#allocation2 + $0x2b0] sm:$0xff]
    %v291 = vld [vmem:[#allocation2 + $0x2b8] sm:$0xff]
    %v292 = vld [vmem:[#allocation2 + $0x2c0] sm:$0xff]
    %v293 = vld [vmem:[#allocation2 + $0x2c8] sm:$0xff]
    %v294 = vld [vmem:[#allocation2 + $0x2d0] sm:$0xff]
    %v295 = vld [vmem:[#allocation2 + $0x2d8] sm:$0xff]
    %v296 = vld [vmem:[#allocation2 + $0x2e0] sm:$0xff]
    %v297 = vld [vmem:[#allocation2 + $0x2e8] sm:$0xff]
    %v298 = vld [vmem:[#allocation2 + $0x2f0] sm:$0xff]
    %v299 = vld [vmem:[#allocation2 + $0x2f8] sm:$0xff]
    %v300 = vld [vmem:[#allocation2 + $0x300] sm:$0xff]
    %v301 = vld [vmem:[#allocation2 + $0x308] sm:$0xff]
    %v302 = vld [vmem:[#allocation2 + $0x310] sm:$0xff]
    %v303 = vld [vmem:[#allocation2 + $0x318] sm:$0xff]
    %v304 = vld [vmem:[#allocation2 + $0x320] sm:$0xff]
    %v305 = vld [vmem:[#allocation2 + $0x328] sm:$0xff]
    %v306 = vld [vmem:[#allocation2 + $0x330] sm:$0xff]
    %v307 = vld [vmem:[#allocation2 + $0x338] sm:$0xff]
    %v308 = vld [vmem:[#allocation2 + $0x340] sm:$0xff]
    %v309 = vld [vmem:[#allocation2 + $0x348] sm:$0xff]
    %v310 = vld [vmem:[#allocation2 + $0x350] sm:$0xff]
    %v311 = vld [vmem:[#allocation2 + $0x358] sm:$0xff]
    %v312 = vld [vmem:[#allocation2 + $0x360] sm:$0xff]
    %v313 = vld [vmem:[#allocation2 + $0x368] sm:$0xff]
    %v314 = vld [vmem:[#allocation2 + $0x370] sm:$0xff]
    %v315 = vld [vmem:[#allocation2 + $0x378] sm:$0xff]
    %v316 = vlog2.pop %v260
    %v317 = vmul.f32 %v316, 0.6931472
    %v318 = vlog2.pop %v261
    %v319 = vmul.f32 %v318, 0.6931472
    %v320 = vlog2.pop %v262
    %v321 = vmul.f32 %v320, 0.6931472
    %v322 = vlog2.pop %v263
    %v323 = vmul.f32 %v322, 0.6931472
    %v324 = vlog2.pop %v264
    %v325 = vmul.f32 %v324, 0.6931472
    %v326 = vlog2.pop %v265
    %v327 = vmul.f32 %v326, 0.6931472
    %v328 = vlog2.pop %v266
    %v329 = vmul.f32 %v328, 0.6931472
    %v330 = vlog2.pop %v267
    %v331 = vmul.f32 %v330, 0.6931472
    %v332 = vlog2.pop %v268
    %v333 = vmul.f32 %v332, 0.6931472
    %v334 = vlog2.pop %v269
    %v335 = vmul.f32 %v334, 0.6931472
    %v336 = vlog2.pop %v270
    %v337 = vmul.f32 %v336, 0.6931472
    %v338 = vlog2.pop %v271
    %v339 = vmul.f32 %v338, 0.6931472
    %v340 = vlog2.pop %v272
    %v341 = vmul.f32 %v340, 0.6931472
    %v342 = vlog2.pop %v273
    %v343 = vmul.f32 %v342, 0.6931472
    %v344 = vlog2.pop %v274
    %v345 = vmul.f32 %v344, 0.6931472
    %v346 = vlog2.pop %v275
    %v347 = vmul.f32 %v346, 0.6931472
    %v348 = vlog2.pop %v276
    %v349 = vmul.f32 %v348, 0.6931472
    %v350 = vlog2.pop %v277
    %v351 = vmul.f32 %v350, 0.6931472
    %v352 = vlog2.pop %v278
    %v353 = vmul.f32 %v352, 0.6931472
    %v354 = vlog2.pop %v279
    %v355 = vmul.f32 %v354, 0.6931472
    %v356 = vlog2.pop %v280
    %v357 = vmul.f32 %v356, 0.6931472
    %v358 = vlog2.pop %v281
    %v359 = vmul.f32 %v358, 0.6931472
    %v360 = vlog2.pop %v282
    %v361 = vmul.f32 %v360, 0.6931472
    %v362 = vlog2.pop %v283
    %v363 = vmul.f32 %v362, 0.6931472
    %v364 = vlog2.pop %v284
    %v365 = vmul.f32 %v364, 0.6931472
    %v366 = vlog2.pop %v285
    %v367 = vmul.f32 %v366, 0.6931472
    %v368 = vlog2.pop %v286
    %v369 = vmul.f32 %v368, 0.6931472
    %v370 = vlog2.pop %v287
    %v371 = vmul.f32 %v370, 0.6931472
    %v372 = vlog2.pop %v288
    %v373 = vmul.f32 %v372, 0.6931472
    %v374 = vlog2.pop %v289
    %v375 = vmul.f32 %v374, 0.6931472
    %v376 = vlog2.pop %v290
    %v377 = vmul.f32 %v376, 0.6931472
    %v378 = vlog2.pop %v291
    %v379 = vmul.f32 %v378, 0.6931472
    %v380 = vlog2.pop %v292
    %v381 = vmul.f32 %v380, 0.6931472
    %v382 = vlog2.pop %v293
    %v383 = vmul.f32 %v382, 0.6931472
    %v384 = vlog2.pop %v294
    %v385 = vmul.f32 %v384, 0.6931472
    %v386 = vlog2.pop %v295
    %v387 = vmul.f32 %v386, 0.6931472
    %v388 = vlog2.pop %v296
    %v389 = vmul.f32 %v388, 0.6931472
    %v390 = vlog2.pop %v297
    %v391 = vmul.f32 %v390, 0.6931472
    %v392 = vlog2.pop %v298
    %v393 = vmul.f32 %v392, 0.6931472
    %v394 = vlog2.pop %v299
    %v395 = vmul.f32 %v394, 0.6931472
    %v396 = vlog2.pop %v300
    %v397 = vmul.f32 %v396, 0.6931472
    %v398 = vlog2.pop %v301
    %v399 = vmul.f32 %v398, 0.6931472
    %v400 = vlog2.pop %v302
    %v401 = vmul.f32 %v400, 0.6931472
    %v402 = vlog2.pop %v303
    %v403 = vmul.f32 %v402, 0.6931472
    %v404 = vlog2.pop %v304
    %v405 = vmul.f32 %v404, 0.6931472
    %v406 = vlog2.pop %v305
    %v407 = vmul.f32 %v406, 0.6931472
    %v408 = vlog2.pop %v306
    %v409 = vmul.f32 %v408, 0.6931472
    %v410 = vlog2.pop %v307
    %v411 = vmul.f32 %v410, 0.6931472
    %v412 = vlog2.pop %v308
    %v413 = vmul.f32 %v412, 0.6931472
    %v414 = vlog2.pop %v309
    %v415 = vmul.f32 %v414, 0.6931472
    %v416 = vlog2.pop %v310
    %v417 = vmul.f32 %v416, 0.6931472
    %v418 = vlog2.pop %v311
    %v419 = vmul.f32 %v418, 0.6931472
    %v420 = vlog2.pop %v312
    %v421 = vmul.f32 %v420, 0.6931472
    %v422 = vlog2.pop %v313
    %v423 = vmul.f32 %v422, 0.6931472
    %v424 = vlog2.pop %v314
    %v425 = vmul.f32 %v424, 0.6931472
    %v426 = vlog2.pop %v315
    %v427 = vmul.f32 %v426, 0.6931472
    %v428 = vadd.f32 %v317, %v319
    %v429 = vadd.f32 %v428, %v321
    %v430 = vadd.f32 %v429, %v323
    %v431 = vadd.f32 %v430, %v325
    %v432 = vadd.f32 %v431, %v327
    %v433 = vadd.f32 %v432, %v329
    %v434 = vadd.f32 %v433, %v331
    %v435 = vadd.f32 %v434, %v333
    %v436 = vadd.f32 %v435, %v335
    %v437 = vadd.f32 %v436, %v337
    %v438 = vadd.f32 %v437, %v339
    %v439 = vadd.f32 %v438, %v341
    %v440 = vadd.f32 %v439, %v343
    %v441 = vadd.f32 %v440, %v345
    %v442 = vadd.f32 %v441, %v347
    %v443 = vadd.f32 %v442, %v349
    %v444 = vadd.f32 %v443, %v351
    %v445 = vadd.f32 %v444, %v353
    %v446 = vadd.f32 %v445, %v355
    %v447 = vadd.f32 %v446, %v357
    %v448 = vadd.f32 %v447, %v359
    %v449 = vadd.f32 %v448, %v361
    %v450 = vadd.f32 %v449, %v363
    %v451 = vadd.f32 %v450, %v365
    %v452 = vadd.f32 %v451, %v367
    %v453 = vadd.f32 %v452, %v369
    %v454 = vadd.f32 %v453, %v371
    %v455 = vadd.f32 %v454, %v373
    %v456 = vadd.f32 %v455, %v375
    %v457 = vadd.f32 %v456, %v377
    %v458 = vadd.f32 %v457, %v379
    %v459 = vadd.f32 %v458, %v381
    %v460 = vadd.f32 %v459, %v383
    %v461 = vadd.f32 %v460, %v385
    %v462 = vadd.f32 %v461, %v387
    %v463 = vadd.f32 %v462, %v389
    %v464 = vadd.f32 %v463, %v391
    %v465 = vadd.f32 %v464, %v393
    %v466 = vadd.f32 %v465, %v395
    %v467 = vadd.f32 %v466, %v397
    %v468 = vadd.f32 %v467, %v399
    %v469 = vadd.f32 %v468, %v401
    %v470 = vadd.f32 %v469, %v403
    %v471 = vadd.f32 %v470, %v405
    %v472 = vadd.f32 %v471, %v407
    %v473 = vadd.f32 %v472, %v409
    %v474 = vadd.f32 %v473, %v411
    %v475 = vadd.f32 %v474, %v413
    %v476 = vadd.f32 %v475, %v415
    %v477 = vadd.f32 %v476, %v417
    %v478 = vadd.f32 %v477, %v419
    %v479 = vadd.f32 %v478, %v421
    %v480 = vadd.f32 %v479, %v423
    %v481 = vadd.f32 %v480, %v425
    %v482 = vadd.f32 %v481, %v427
    %v483 = vadd.f32 %v259, %v482
    %v484 = vld [vmem:[#allocation2 + $0x380] sm:$0xff]
    %v485 = vld [vmem:[#allocation2 + $0x388] sm:$0xff]
    %v486 = vld [vmem:[#allocation2 + $0x390] sm:$0xff]
    %v487 = vld [vmem:[#allocation2 + $0x398] sm:$0xff]
    %v488 = vld [vmem:[#allocation2 + $0x3a0] sm:$0xff]
    %v489 = vld [vmem:[#allocation2 + $0x3a8] sm:$0xff]
    %v490 = vld [vmem:[#allocation2 + $0x3b0] sm:$0xff]
    %v491 = vld [vmem:[#allocation2 + $0x3b8] sm:$0xff]
    %v492 = vld [vmem:[#allocation2 + $0x3c0] sm:$0xff]
    %v493 = vld [vmem:[#allocation2 + $0x3c8] sm:$0xff]
    %v494 = vld [vmem:[#allocation2 + $0x3d0] sm:$0xff]
    %v495 = vld [vmem:[#allocation2 + $0x3d8] sm:$0xff]
    %v496 = vld [vmem:[#allocation2 + $0x3e0] sm:$0xff]
    %v497 = vld [vmem:[#allocation2 + $0x3e8] sm:$0xff]
    %v498 = vld [vmem:[#allocation2 + $0x3f0] sm:$0xff]
    %v499 = vld [vmem:[#allocation2 + $0x3f8] sm:$0xff]
    %v500 = vld [vmem:[#allocation2 + $0x400] sm:$0xff]
    %v501 = vld [vmem:[#allocation2 + $0x408] sm:$0xff]
    %v502 = vld [vmem:[#allocation2 + $0x410] sm:$0xff]
    %v503 = vld [vmem:[#allocation2 + $0x418] sm:$0xff]
    %v504 = vld [vmem:[#allocation2 + $0x420] sm:$0xff]
    %v505 = vld [vmem:[#allocation2 + $0x428] sm:$0xff]
    %v506 = vld [vmem:[#allocation2 + $0x430] sm:$0xff]
    %v507 = vld [vmem:[#allocation2 + $0x438] sm:$0xff]
    %v508 = vld [vmem:[#allocation2 + $0x440] sm:$0xff]
    %v509 = vld [vmem:[#allocation2 + $0x448] sm:$0xff]
    %v510 = vld [vmem:[#allocation2 + $0x450] sm:$0xff]
    %v511 = vld [vmem:[#allocation2 + $0x458] sm:$0xff]
    %v512 = vld [vmem:[#allocation2 + $0x460] sm:$0xff]
    %v513 = vld [vmem:[#allocation2 + $0x468] sm:$0xff]
    %v514 = vld [vmem:[#allocation2 + $0x470] sm:$0xff]
    %v515 = vld [vmem:[#allocation2 + $0x478] sm:$0xff]
    %v516 = vld [vmem:[#allocation2 + $0x480] sm:$0xff]
    %v517 = vld [vmem:[#allocation2 + $0x488] sm:$0xff]
    %v518 = vld [vmem:[#allocation2 + $0x490] sm:$0xff]
    %v519 = vld [vmem:[#allocation2 + $0x498] sm:$0xff]
    %v520 = vld [vmem:[#allocation2 + $0x4a0] sm:$0xff]
    %v521 = vld [vmem:[#allocation2 + $0x4a8] sm:$0xff]
    %v522 = vld [vmem:[#allocation2 + $0x4b0] sm:$0xff]
    %v523 = vld [vmem:[#allocation2 + $0x4b8] sm:$0xff]
    %v524 = vld [vmem:[#allocation2 + $0x4c0] sm:$0xff]
    %v525 = vld [vmem:[#allocation2 + $0x4c8] sm:$0xff]
    %v526 = vld [vmem:[#allocation2 + $0x4d0] sm:$0xff]
    %v527 = vld [vmem:[#allocation2 + $0x4d8] sm:$0xff]
    %v528 = vld [vmem:[#allocation2 + $0x4e0] sm:$0xff]
    %v529 = vld [vmem:[#allocation2 + $0x4e8] sm:$0xff]
    %v530 = vld [vmem:[#allocation2 + $0x4f0] sm:$0xff]
    %v531 = vld [vmem:[#allocation2 + $0x4f8] sm:$0xff]
    %v532 = vld [vmem:[#allocation2 + $0x500] sm:$0xff]
    %v533 = vld [vmem:[#allocation2 + $0x508] sm:$0xff]
    %v534 = vld [vmem:[#allocation2 + $0x510] sm:$0xff]
    %v535 = vld [vmem:[#allocation2 + $0x518] sm:$0xff]
    %v536 = vld [vmem:[#allocation2 + $0x520] sm:$0xff]
    %v537 = vld [vmem:[#allocation2 + $0x528] sm:$0xff]
    %v538 = vld [vmem:[#allocation2 + $0x530] sm:$0xff]
    %v539 = vld [vmem:[#allocation2 + $0x538] sm:$0xff]
    %v540 = vlog2.pop %v484
    %v541 = vmul.f32 %v540, 0.6931472
    %v542 = vlog2.pop %v485
    %v543 = vmul.f32 %v542, 0.6931472
    %v544 = vlog2.pop %v486
    %v545 = vmul.f32 %v544, 0.6931472
    %v546 = vlog2.pop %v487
    %v547 = vmul.f32 %v546, 0.6931472
    %v548 = vlog2.pop %v488
    %v549 = vmul.f32 %v548, 0.6931472
    %v550 = vlog2.pop %v489
    %v551 = vmul.f32 %v550, 0.6931472
    %v552 = vlog2.pop %v490
    %v553 = vmul.f32 %v552, 0.6931472
    %v554 = vlog2.pop %v491
    %v555 = vmul.f32 %v554, 0.6931472
    %v556 = vlog2.pop %v492
    %v557 = vmul.f32 %v556, 0.6931472
    %v558 = vlog2.pop %v493
    %v559 = vmul.f32 %v558, 0.6931472
    %v560 = vlog2.pop %v494
    %v561 = vmul.f32 %v560, 0.6931472
    %v562 = vlog2.pop %v495
    %v563 = vmul.f32 %v562, 0.6931472
    %v564 = vlog2.pop %v496
    %v565 = vmul.f32 %v564, 0.6931472
    %v566 = vlog2.pop %v497
    %v567 = vmul.f32 %v566, 0.6931472
    %v568 = vlog2.pop %v498
    %v569 = vmul.f32 %v568, 0.6931472
    %v570 = vlog2.pop %v499
    %v571 = vmul.f32 %v570, 0.6931472
    %v572 = vlog2.pop %v500
    %v573 = vmul.f32 %v572, 0.6931472
    %v574 = vlog2.pop %v501
    %v575 = vmul.f32 %v574, 0.6931472
    %v576 = vlog2.pop %v502
    %v577 = vmul.f32 %v576, 0.6931472
    %v578 = vlog2.pop %v503
    %v579 = vmul.f32 %v578, 0.6931472
    %v580 = vlog2.pop %v504
    %v581 = vmul.f32 %v580, 0.6931472
    %v582 = vlog2.pop %v505
    %v583 = vmul.f32 %v582, 0.6931472
    %v584 = vlog2.pop %v506
    %v585 = vmul.f32 %v584, 0.6931472
    %v586 = vlog2.pop %v507
    %v587 = vmul.f32 %v586, 0.6931472
    %v588 = vlog2.pop %v508
    %v589 = vmul.f32 %v588, 0.6931472
    %v590 = vlog2.pop %v509
    %v591 = vmul.f32 %v590, 0.6931472
    %v592 = vlog2.pop %v510
    %v593 = vmul.f32 %v592, 0.6931472
    %v594 = vlog2.pop %v511
    %v595 = vmul.f32 %v594, 0.6931472
    %v596 = vlog2.pop %v512
    %v597 = vmul.f32 %v596, 0.6931472
    %v598 = vlog2.pop %v513
    %v599 = vmul.f32 %v598, 0.6931472
    %v600 = vlog2.pop %v514
    %v601 = vmul.f32 %v600, 0.6931472
    %v602 = vlog2.pop %v515
    %v603 = vmul.f32 %v602, 0.6931472
    %v604 = vlog2.pop %v516
    %v605 = vmul.f32 %v604, 0.6931472
    %v606 = vlog2.pop %v517
    %v607 = vmul.f32 %v606, 0.6931472
    %v608 = vlog2.pop %v518
    %v609 = vmul.f32 %v608, 0.6931472
    %v610 = vlog2.pop %v519
    %v611 = vmul.f32 %v610, 0.6931472
    %v612 = vlog2.pop %v520
    %v613 = vmul.f32 %v612, 0.6931472
    %v614 = vlog2.pop %v521
    %v615 = vmul.f32 %v614, 0.6931472
    %v616 = vlog2.pop %v522
    %v617 = vmul.f32 %v616, 0.6931472
    %v618 = vlog2.pop %v523
    %v619 = vmul.f32 %v618, 0.6931472
    %v620 = vlog2.pop %v524
    %v621 = vmul.f32 %v620, 0.6931472
    %v622 = vlog2.pop %v525
    %v623 = vmul.f32 %v622, 0.6931472
    %v624 = vlog2.pop %v526
    %v625 = vmul.f32 %v624, 0.6931472
    %v626 = vlog2.pop %v527
    %v627 = vmul.f32 %v626, 0.6931472
    %v628 = vlog2.pop %v528
    %v629 = vmul.f32 %v628, 0.6931472
    %v630 = vlog2.pop %v529
    %v631 = vmul.f32 %v630, 0.6931472
    %v632 = vlog2.pop %v530
    %v633 = vmul.f32 %v632, 0.6931472
    %v634 = vlog2.pop %v531
    %v635 = vmul.f32 %v634, 0.6931472
    %v636 = vlog2.pop %v532
    %v637 = vmul.f32 %v636, 0.6931472
    %v638 = vlog2.pop %v533
    %v639 = vmul.f32 %v638, 0.6931472
    %v640 = vlog2.pop %v534
    %v641 = vmul.f32 %v640, 0.6931472
    %v642 = vlog2.pop %v535
    %v643 = vmul.f32 %v642, 0.6931472
    %v644 = vlog2.pop %v536
    %v645 = vmul.f32 %v644, 0.6931472
    %v646 = vlog2.pop %v537
    %v647 = vmul.f32 %v646, 0.6931472
    %v648 = vlog2.pop %v538
    %v649 = vmul.f32 %v648, 0.6931472
    %v650 = vlog2.pop %v539
    %v651 = vmul.f32 %v650, 0.6931472
    %v652 = vadd.f32 %v541, %v543
    %v653 = vadd.f32 %v652, %v545
    %v654 = vadd.f32 %v653, %v547
    %v655 = vadd.f32 %v654, %v549
    %v656 = vadd.f32 %v655, %v551
    %v657 = vadd.f32 %v656, %v553
    %v658 = vadd.f32 %v657, %v555
    %v659 = vadd.f32 %v658, %v557
    %v660 = vadd.f32 %v659, %v559
    %v661 = vadd.f32 %v660, %v561
    %v662 = vadd.f32 %v661, %v563
    %v663 = vadd.f32 %v662, %v565
    %v664 = vadd.f32 %v663, %v567
    %v665 = vadd.f32 %v664, %v569
    %v666 = vadd.f32 %v665, %v571
    %v667 = vadd.f32 %v666, %v573
    %v668 = vadd.f32 %v667, %v575
    %v669 = vadd.f32 %v668, %v577
    %v670 = vadd.f32 %v669, %v579
    %v671 = vadd.f32 %v670, %v581
    %v672 = vadd.f32 %v671, %v583
    %v673 = vadd.f32 %v672, %v585
    %v674 = vadd.f32 %v673, %v587
    %v675 = vadd.f32 %v674, %v589
    %v676 = vadd.f32 %v675, %v591
    %v677 = vadd.f32 %v676, %v593
    %v678 = vadd.f32 %v677, %v595
    %v679 = vadd.f32 %v678, %v597
    %v680 = vadd.f32 %v679, %v599
    %v681 = vadd.f32 %v680, %v601
    %v682 = vadd.f32 %v681, %v603
    %v683 = vadd.f32 %v682, %v605
    %v684 = vadd.f32 %v683, %v607
    %v685 = vadd.f32 %v684, %v609
    %v686 = vadd.f32 %v685, %v611
    %v687 = vadd.f32 %v686, %v613
    %v688 = vadd.f32 %v687, %v615
    %v689 = vadd.f32 %v688, %v617
    %v690 = vadd.f32 %v689, %v619
    %v691 = vadd.f32 %v690, %v621
    %v692 = vadd.f32 %v691, %v623
    %v693 = vadd.f32 %v692, %v625
    %v694 = vadd.f32 %v693, %v627
    %v695 = vadd.f32 %v694, %v629
    %v696 = vadd.f32 %v695, %v631
    %v697 = vadd.f32 %v696, %v633
    %v698 = vadd.f32 %v697, %v635
    %v699 = vadd.f32 %v698, %v637
    %v700 = vadd.f32 %v699, %v639
    %v701 = vadd.f32 %v700, %v641
    %v702 = vadd.f32 %v701, %v643
    %v703 = vadd.f32 %v702, %v645
    %v704 = vadd.f32 %v703, %v647
    %v705 = vadd.f32 %v704, %v649
    %v706 = vadd.f32 %v705, %v651
    %v707 = vadd.f32 %v483, %v706
    %v708 = vld [vmem:[#allocation2 + $0x540] sm:$0xff]
    %v709 = vld [vmem:[#allocation2 + $0x548] sm:$0xff]
    %v710 = vld [vmem:[#allocation2 + $0x550] sm:$0xff]
    %v711 = vld [vmem:[#allocation2 + $0x558] sm:$0xff]
    %v712 = vld [vmem:[#allocation2 + $0x560] sm:$0xff]
    %v713 = vld [vmem:[#allocation2 + $0x568] sm:$0xff]
    %v714 = vld [vmem:[#allocation2 + $0x570] sm:$0xff]
    %v715 = vld [vmem:[#allocation2 + $0x578] sm:$0xff]
    %v716 = vld [vmem:[#allocation2 + $0x580] sm:$0xff]
    %v717 = vld [vmem:[#allocation2 + $0x588] sm:$0xff]
    %v718 = vld [vmem:[#allocation2 + $0x590] sm:$0xff]
    %v719 = vld [vmem:[#allocation2 + $0x598] sm:$0xff]
    %v720 = vld [vmem:[#allocation2 + $0x5a0] sm:$0xff]
    %v721 = vld [vmem:[#allocation2 + $0x5a8] sm:$0xff]
    %v722 = vld [vmem:[#allocation2 + $0x5b0] sm:$0xff]
    %v723 = vld [vmem:[#allocation2 + $0x5b8] sm:$0xff]
    %v724 = vld [vmem:[#allocation2 + $0x5c0] sm:$0xff]
    %v725 = vld [vmem:[#allocation2 + $0x5c8] sm:$0xff]
    %v726 = vld [vmem:[#allocation2 + $0x5d0] sm:$0xff]
    %v727 = vld [vmem:[#allocation2 + $0x5d8] sm:$0xff]
    %v728 = vld [vmem:[#allocation2 + $0x5e0] sm:$0xff]
    %v729 = vld [vmem:[#allocation2 + $0x5e8] sm:$0xff]
    %v730 = vld [vmem:[#allocation2 + $0x5f0] sm:$0xff]
    %v731 = vld [vmem:[#allocation2 + $0x5f8] sm:$0xff]
    %v732 = vld [vmem:[#allocation2 + $0x600] sm:$0xff]
    %v733 = vld [vmem:[#allocation2 + $0x608] sm:$0xff]
    %v734 = vld [vmem:[#allocation2 + $0x610] sm:$0xff]
    %v735 = vld [vmem:[#allocation2 + $0x618] sm:$0xff]
    %v736 = vld [vmem:[#allocation2 + $0x620] sm:$0xff]
    %v737 = vld [vmem:[#allocation2 + $0x628] sm:$0xff]
    %v738 = vld [vmem:[#allocation2 + $0x630] sm:$0xff]
    %v739 = vld [vmem:[#allocation2 + $0x638] sm:$0xff]
    %v740 = vld [vmem:[#allocation2 + $0x640] sm:$0xff]
    %v741 = vld [vmem:[#allocation2 + $0x648] sm:$0xff]
    %v742 = vld [vmem:[#allocation2 + $0x650] sm:$0xff]
    %v743 = vld [vmem:[#allocation2 + $0x658] sm:$0xff]
    %v744 = vld [vmem:[#allocation2 + $0x660] sm:$0xff]
    %v745 = vld [vmem:[#allocation2 + $0x668] sm:$0xff]
    %v746 = vld [vmem:[#allocation2 + $0x670] sm:$0xff]
    %v747 = vld [vmem:[#allocation2 + $0x678] sm:$0xff]
    %v748 = vld [vmem:[#allocation2 + $0x680] sm:$0xff]
    %v749 = vld [vmem:[#allocation2 + $0x688] sm:$0xff]
    %v750 = vld [vmem:[#allocation2 + $0x690] sm:$0xff]
    %v751 = vld [vmem:[#allocation2 + $0x698] sm:$0xff]
    %v752 = vld [vmem:[#allocation2 + $0x6a0] sm:$0xff]
    %v753 = vld [vmem:[#allocation2 + $0x6a8] sm:$0xff]
    %v754 = vld [vmem:[#allocation2 + $0x6b0] sm:$0xff]
    %v755 = vld [vmem:[#allocation2 + $0x6b8] sm:$0xff]
    %v756 = vld [vmem:[#allocation2 + $0x6c0] sm:$0xff]
    %v757 = vld [vmem:[#allocation2 + $0x6c8] sm:$0xff]
    %v758 = vld [vmem:[#allocation2 + $0x6d0] sm:$0xff]
    %v759 = vld [vmem:[#allocation2 + $0x6d8] sm:$0xff]
    %v760 = vld [vmem:[#allocation2 + $0x6e0] sm:$0xff]
    %v761 = vld [vmem:[#allocation2 + $0x6e8] sm:$0xff]
    %v762 = vld [vmem:[#allocation2 + $0x6f0] sm:$0xff]
    %v763 = vld [vmem:[#allocation2 + $0x6f8] sm:$0xff]
    %v764 = vlog2.pop %v708
    %v765 = vmul.f32 %v764, 0.6931472
    %v766 = vlog2.pop %v709
    %v767 = vmul.f32 %v766, 0.6931472
    %v768 = vlog2.pop %v710
    %v769 = vmul.f32 %v768, 0.6931472
    %v770 = vlog2.pop %v711
    %v771 = vmul.f32 %v770, 0.6931472
    %v772 = vlog2.pop %v712
    %v773 = vmul.f32 %v772, 0.6931472
    %v774 = vlog2.pop %v713
    %v775 = vmul.f32 %v774, 0.6931472
    %v776 = vlog2.pop %v714
    %v777 = vmul.f32 %v776, 0.6931472
    %v778 = vlog2.pop %v715
    %v779 = vmul.f32 %v778, 0.6931472
    %v780 = vlog2.pop %v716
    %v781 = vmul.f32 %v780, 0.6931472
    %v782 = vlog2.pop %v717
    %v783 = vmul.f32 %v782, 0.6931472
    %v784 = vlog2.pop %v718
    %v785 = vmul.f32 %v784, 0.6931472
    %v786 = vlog2.pop %v719
    %v787 = vmul.f32 %v786, 0.6931472
    %v788 = vlog2.pop %v720
    %v789 = vmul.f32 %v788, 0.6931472
    %v790 = vlog2.pop %v721
    %v791 = vmul.f32 %v790, 0.6931472
    %v792 = vlog2.pop %v722
    %v793 = vmul.f32 %v792, 0.6931472
    %v794 = vlog2.pop %v723
    %v795 = vmul.f32 %v794, 0.6931472
    %v796 = vlog2.pop %v724
    %v797 = vmul.f32 %v796, 0.6931472
    %v798 = vlog2.pop %v725
    %v799 = vmul.f32 %v798, 0.6931472
    %v800 = vlog2.pop %v726
    %v801 = vmul.f32 %v800, 0.6931472
    %v802 = vlog2.pop %v727
    %v803 = vmul.f32 %v802, 0.6931472
    %v804 = vlog2.pop %v728
    %v805 = vmul.f32 %v804, 0.6931472
    %v806 = vlog2.pop %v729
    %v807 = vmul.f32 %v806, 0.6931472
    %v808 = vlog2.pop %v730
    %v809 = vmul.f32 %v808, 0.6931472
    %v810 = vlog2.pop %v731
    %v811 = vmul.f32 %v810, 0.6931472
    %v812 = vlog2.pop %v732
    %v813 = vmul.f32 %v812, 0.6931472
    %v814 = vlog2.pop %v733
    %v815 = vmul.f32 %v814, 0.6931472
    %v816 = vlog2.pop %v734
    %v817 = vmul.f32 %v816, 0.6931472
    %v818 = vlog2.pop %v735
    %v819 = vmul.f32 %v818, 0.6931472
    %v820 = vlog2.pop %v736
    %v821 = vmul.f32 %v820, 0.6931472
    %v822 = vlog2.pop %v737
    %v823 = vmul.f32 %v822, 0.6931472
    %v824 = vlog2.pop %v738
    %v825 = vmul.f32 %v824, 0.6931472
    %v826 = vlog2.pop %v739
    %v827 = vmul.f32 %v826, 0.6931472
    %v828 = vlog2.pop %v740
    %v829 = vmul.f32 %v828, 0.6931472
    %v830 = vlog2.pop %v741
    %v831 = vmul.f32 %v830, 0.6931472
    %v832 = vlog2.pop %v742
    %v833 = vmul.f32 %v832, 0.6931472
    %v834 = vlog2.pop %v743
    %v835 = vmul.f32 %v834, 0.6931472
    %v836 = vlog2.pop %v744
    %v837 = vmul.f32 %v836, 0.6931472
    %v838 = vlog2.pop %v745
    %v839 = vmul.f32 %v838, 0.6931472
    %v840 = vlog2.pop %v746
    %v841 = vmul.f32 %v840, 0.6931472
    %v842 = vlog2.pop %v747
    %v843 = vmul.f32 %v842, 0.6931472
    %v844 = vlog2.pop %v748
    %v845 = vmul.f32 %v844, 0.6931472
    %v846 = vlog2.pop %v749
    %v847 = vmul.f32 %v846, 0.6931472
    %v848 = vlog2.pop %v750
    %v849 = vmul.f32 %v848, 0.6931472
    %v850 = vlog2.pop %v751
    %v851 = vmul.f32 %v850, 0.6931472
    %v852 = vlog2.pop %v752
    %v853 = vmul.f32 %v852, 0.6931472
    %v854 = vlog2.pop %v753
    %v855 = vmul.f32 %v854, 0.6931472
    %v856 = vlog2.pop %v754
    %v857 = vmul.f32 %v856, 0.6931472
    %v858 = vlog2.pop %v755
    %v859 = vmul.f32 %v858, 0.6931472
    %v860 = vlog2.pop %v756
    %v861 = vmul.f32 %v860, 0.6931472
    %v862 = vlog2.pop %v757
    %v863 = vmul.f32 %v862, 0.6931472
    %v864 = vlog2.pop %v758
    %v865 = vmul.f32 %v864, 0.6931472
    %v866 = vlog2.pop %v759
    %v867 = vmul.f32 %v866, 0.6931472
    %v868 = vlog2.pop %v760
    %v869 = vmul.f32 %v868, 0.6931472
    %v870 = vlog2.pop %v761
    %v871 = vmul.f32 %v870, 0.6931472
    %v872 = vlog2.pop %v762
    %v873 = vmul.f32 %v872, 0.6931472
    %v874 = vlog2.pop %v763
    %v875 = vmul.f32 %v874, 0.6931472
    %v876 = vadd.f32 %v765, %v767
    %v877 = vadd.f32 %v876, %v769
    %v878 = vadd.f32 %v877, %v771
    %v879 = vadd.f32 %v878, %v773
    %v880 = vadd.f32 %v879, %v775
    %v881 = vadd.f32 %v880, %v777
    %v882 = vadd.f32 %v881, %v779
    %v883 = vadd.f32 %v882, %v781
    %v884 = vadd.f32 %v883, %v783
    %v885 = vadd.f32 %v884, %v785
    %v886 = vadd.f32 %v885, %v787
    %v887 = vadd.f32 %v886, %v789
    %v888 = vadd.f32 %v887, %v791
    %v889 = vadd.f32 %v888, %v793
    %v890 = vadd.f32 %v889, %v795
    %v891 = vadd.f32 %v890, %v797
    %v892 = vadd.f32 %v891, %v799
    %v893 = vadd.f32 %v892, %v801
    %v894 = vadd.f32 %v893, %v803
    %v895 = vadd.f32 %v894, %v805
    %v896 = vadd.f32 %v895, %v807
    %v897 = vadd.f32 %v896, %v809
    %v898 = vadd.f32 %v897, %v811
    %v899 = vadd.f32 %v898, %v813
    %v900 = vadd.f32 %v899, %v815
    %v901 = vadd.f32 %v900, %v817
    %v902 = vadd.f32 %v901, %v819
    %v903 = vadd.f32 %v902, %v821
    %v904 = vadd.f32 %v903, %v823
    %v905 = vadd.f32 %v904, %v825
    %v906 = vadd.f32 %v905, %v827
    %v907 = vadd.f32 %v906, %v829
    %v908 = vadd.f32 %v907, %v831
    %v909 = vadd.f32 %v908, %v833
    %v910 = vadd.f32 %v909, %v835
    %v911 = vadd.f32 %v910, %v837
    %v912 = vadd.f32 %v911, %v839
    %v913 = vadd.f32 %v912, %v841
    %v914 = vadd.f32 %v913, %v843
    %v915 = vadd.f32 %v914, %v845
    %v916 = vadd.f32 %v915, %v847
    %v917 = vadd.f32 %v916, %v849
    %v918 = vadd.f32 %v917, %v851
    %v919 = vadd.f32 %v918, %v853
    %v920 = vadd.f32 %v919, %v855
    %v921 = vadd.f32 %v920, %v857
    %v922 = vadd.f32 %v921, %v859
    %v923 = vadd.f32 %v922, %v861
    %v924 = vadd.f32 %v923, %v863
    %v925 = vadd.f32 %v924, %v865
    %v926 = vadd.f32 %v925, %v867
    %v927 = vadd.f32 %v926, %v869
    %v928 = vadd.f32 %v927, %v871
    %v929 = vadd.f32 %v928, %v873
    %v930 = vadd.f32 %v929, %v875
    %v931 = vadd.f32 %v707, %v930
    %v932 = vld [vmem:[#allocation2 + $0x700] sm:$0xff]
    %v933 = vld [vmem:[#allocation2 + $0x708] sm:$0xff]
    %v934 = vld [vmem:[#allocation2 + $0x710] sm:$0xff]
    %v935 = vld [vmem:[#allocation2 + $0x718] sm:$0xff]
    %v936 = vld [vmem:[#allocation2 + $0x720] sm:$0xff]
    %v937 = vld [vmem:[#allocation2 + $0x728] sm:$0xff]
    %v938 = vld [vmem:[#allocation2 + $0x730] sm:$0xff]
    %v939 = vld [vmem:[#allocation2 + $0x738] sm:$0xff]
    %v940 = vld [vmem:[#allocation2 + $0x740] sm:$0xff]
    %v941 = vld [vmem:[#allocation2 + $0x748] sm:$0xff]
    %v942 = vld [vmem:[#allocation2 + $0x750] sm:$0xff]
    %v943 = vld [vmem:[#allocation2 + $0x758] sm:$0xff]
    %v944 = vld [vmem:[#allocation2 + $0x760] sm:$0xff]
    %v945 = vld [vmem:[#allocation2 + $0x768] sm:$0xff]
    %v946 = vld [vmem:[#allocation2 + $0x770] sm:$0xff]
    %v947 = vld [vmem:[#allocation2 + $0x778] sm:$0xff]
    %v948 = vld [vmem:[#allocation2 + $0x780] sm:$0xff]
    %v949 = vld [vmem:[#allocation2 + $0x788] sm:$0xff]
    %v950 = vld [vmem:[#allocation2 + $0x790] sm:$0xff]
    %v951 = vld [vmem:[#allocation2 + $0x798] sm:$0xff]
    %v952 = vld [vmem:[#allocation2 + $0x7a0] sm:$0xff]
    %v953 = vld [vmem:[#allocation2 + $0x7a8] sm:$0xff]
    %v954 = vld [vmem:[#allocation2 + $0x7b0] sm:$0xff]
    %v955 = vld [vmem:[#allocation2 + $0x7b8] sm:$0xff]
    %v956 = vld [vmem:[#allocation2 + $0x7c0] sm:$0xff]
    %v957 = vld [vmem:[#allocation2 + $0x7c8] sm:$0xff]
    %v958 = vld [vmem:[#allocation2 + $0x7d0] sm:$0xff]
    %v959 = vld [vmem:[#allocation2 + $0x7d8] sm:$0xff]
    %v960 = vld [vmem:[#allocation2 + $0x7e0] sm:$0xff]
    %v961 = vld [vmem:[#allocation2 + $0x7e8] sm:$0xff]
    %v962 = vld [vmem:[#allocation2 + $0x7f0] sm:$0xff]
    %v963 = vld [vmem:[#allocation2 + $0x7f8] sm:$0xff]
    %v964 = vld [vmem:[#allocation2 + $0x800] sm:$0xff]
    %v965 = vld [vmem:[#allocation2 + $0x808] sm:$0xff]
    %v966 = vld [vmem:[#allocation2 + $0x810] sm:$0xff]
    %v967 = vld [vmem:[#allocation2 + $0x818] sm:$0xff]
    %v968 = vld [vmem:[#allocation2 + $0x820] sm:$0xff]
    %v969 = vld [vmem:[#allocation2 + $0x828] sm:$0xff]
    %v970 = vld [vmem:[#allocation2 + $0x830] sm:$0xff]
    %v971 = vld [vmem:[#allocation2 + $0x838] sm:$0xff]
    %v972 = vld [vmem:[#allocation2 + $0x840] sm:$0xff]
    %v973 = vld [vmem:[#allocation2 + $0x848] sm:$0xff]
    %v974 = vld [vmem:[#allocation2 + $0x850] sm:$0xff]
    %v975 = vld [vmem:[#allocation2 + $0x858] sm:$0xff]
    %v976 = vld [vmem:[#allocation2 + $0x860] sm:$0xff]
    %v977 = vld [vmem:[#allocation2 + $0x868] sm:$0xff]
    %v978 = vld [vmem:[#allocation2 + $0x870] sm:$0xff]
    %v979 = vld [vmem:[#allocation2 + $0x878] sm:$0xff]
    %v980 = vld [vmem:[#allocation2 + $0x880] sm:$0xff]
    %v981 = vld [vmem:[#allocation2 + $0x888] sm:$0xff]
    %v982 = vld [vmem:[#allocation2 + $0x890] sm:$0xff]
    %v983 = vld [vmem:[#allocation2 + $0x898] sm:$0xff]
    %v984 = vld [vmem:[#allocation2 + $0x8a0] sm:$0xff]
    %v985 = vld [vmem:[#allocation2 + $0x8a8] sm:$0xff]
    %v986 = vld [vmem:[#allocation2 + $0x8b0] sm:$0xff]
    %v987 = vld [vmem:[#allocation2 + $0x8b8] sm:$0xff]
    %v988 = vlog2.pop %v932
    %v989 = vmul.f32 %v988, 0.6931472
    %v990 = vlog2.pop %v933
    %v991 = vmul.f32 %v990, 0.6931472
    %v992 = vlog2.pop %v934
    %v993 = vmul.f32 %v992, 0.6931472
    %v994 = vlog2.pop %v935
    %v995 = vmul.f32 %v994, 0.6931472
    %v996 = vlog2.pop %v936
    %v997 = vmul.f32 %v996, 0.6931472
    %v998 = vlog2.pop %v937
    %v999 = vmul.f32 %v998, 0.6931472
    %v1000 = vlog2.pop %v938
    %v1001 = vmul.f32 %v1000, 0.6931472
    %v1002 = vlog2.pop %v939
    %v1003 = vmul.f32 %v1002, 0.6931472
    %v1004 = vlog2.pop %v940
    %v1005 = vmul.f32 %v1004, 0.6931472
    %v1006 = vlog2.pop %v941
    %v1007 = vmul.f32 %v1006, 0.6931472
    %v1008 = vlog2.pop %v942
    %v1009 = vmul.f32 %v1008, 0.6931472
    %v1010 = vlog2.pop %v943
    %v1011 = vmul.f32 %v1010, 0.6931472
    %v1012 = vlog2.pop %v944
    %v1013 = vmul.f32 %v1012, 0.6931472
    %v1014 = vlog2.pop %v945
    %v1015 = vmul.f32 %v1014, 0.6931472
    %v1016 = vlog2.pop %v946
    %v1017 = vmul.f32 %v1016, 0.6931472
    %v1018 = vlog2.pop %v947
    %v1019 = vmul.f32 %v1018, 0.6931472
    %v1020 = vlog2.pop %v948
    %v1021 = vmul.f32 %v1020, 0.6931472
    %v1022 = vlog2.pop %v949
    %v1023 = vmul.f32 %v1022, 0.6931472
    %v1024 = vlog2.pop %v950
    %v1025 = vmul.f32 %v1024, 0.6931472
    %v1026 = vlog2.pop %v951
    %v1027 = vmul.f32 %v1026, 0.6931472
    %v1028 = vlog2.pop %v952
    %v1029 = vmul.f32 %v1028, 0.6931472
    %v1030 = vlog2.pop %v953
    %v1031 = vmul.f32 %v1030, 0.6931472
    %v1032 = vlog2.pop %v954
    %v1033 = vmul.f32 %v1032, 0.6931472
    %v1034 = vlog2.pop %v955
    %v1035 = vmul.f32 %v1034, 0.6931472
    %v1036 = vlog2.pop %v956
    %v1037 = vmul.f32 %v1036, 0.6931472
    %v1038 = vlog2.pop %v957
    %v1039 = vmul.f32 %v1038, 0.6931472
    %v1040 = vlog2.pop %v958
    %v1041 = vmul.f32 %v1040, 0.6931472
    %v1042 = vlog2.pop %v959
    %v1043 = vmul.f32 %v1042, 0.6931472
    %v1044 = vlog2.pop %v960
    %v1045 = vmul.f32 %v1044, 0.6931472
    %v1046 = vlog2.pop %v961
    %v1047 = vmul.f32 %v1046, 0.6931472
    %v1048 = vlog2.pop %v962
    %v1049 = vmul.f32 %v1048, 0.6931472
    %v1050 = vlog2.pop %v963
    %v1051 = vmul.f32 %v1050, 0.6931472
    %v1052 = vlog2.pop %v964
    %v1053 = vmul.f32 %v1052, 0.6931472
    %v1054 = vlog2.pop %v965
    %v1055 = vmul.f32 %v1054, 0.6931472
    %v1056 = vlog2.pop %v966
    %v1057 = vmul.f32 %v1056, 0.6931472
    %v1058 = vlog2.pop %v967
    %v1059 = vmul.f32 %v1058, 0.6931472
    %v1060 = vlog2.pop %v968
    %v1061 = vmul.f32 %v1060, 0.6931472
    %v1062 = vlog2.pop %v969
    %v1063 = vmul.f32 %v1062, 0.6931472
    %v1064 = vlog2.pop %v970
    %v1065 = vmul.f32 %v1064, 0.6931472
    %v1066 = vlog2.pop %v971
    %v1067 = vmul.f32 %v1066, 0.6931472
    %v1068 = vlog2.pop %v972
    %v1069 = vmul.f32 %v1068, 0.6931472
    %v1070 = vlog2.pop %v973
    %v1071 = vmul.f32 %v1070, 0.6931472
    %v1072 = vlog2.pop %v974
    %v1073 = vmul.f32 %v1072, 0.6931472
    %v1074 = vlog2.pop %v975
    %v1075 = vmul.f32 %v1074, 0.6931472
    %v1076 = vlog2.pop %v976
    %v1077 = vmul.f32 %v1076, 0.6931472
    %v1078 = vlog2.pop %v977
    %v1079 = vmul.f32 %v1078, 0.6931472
    %v1080 = vlog2.pop %v978
    %v1081 = vmul.f32 %v1080, 0.6931472
    %v1082 = vlog2.pop %v979
    %v1083 = vmul.f32 %v1082, 0.6931472
    %v1084 = vlog2.pop %v980
    %v1085 = vmul.f32 %v1084, 0.6931472
    %v1086 = vlog2.pop %v981
    %v1087 = vmul.f32 %v1086, 0.6931472
    %v1088 = vlog2.pop %v982
    %v1089 = vmul.f32 %v1088, 0.6931472
    %v1090 = vlog2.pop %v983
    %v1091 = vmul.f32 %v1090, 0.6931472
    %v1092 = vlog2.pop %v984
    %v1093 = vmul.f32 %v1092, 0.6931472
    %v1094 = vlog2.pop %v985
    %v1095 = vmul.f32 %v1094, 0.6931472
    %v1096 = vlog2.pop %v986
    %v1097 = vmul.f32 %v1096, 0.6931472
    %v1098 = vlog2.pop %v987
    %v1099 = vmul.f32 %v1098, 0.6931472
    %v1100 = vadd.f32 %v989, %v991
    %v1101 = vadd.f32 %v1100, %v993
    %v1102 = vadd.f32 %v1101, %v995
    %v1103 = vadd.f32 %v1102, %v997
    %v1104 = vadd.f32 %v1103, %v999
    %v1105 = vadd.f32 %v1104, %v1001
    %v1106 = vadd.f32 %v1105, %v1003
    %v1107 = vadd.f32 %v1106, %v1005
    %v1108 = vadd.f32 %v1107, %v1007
    %v1109 = vadd.f32 %v1108, %v1009
    %v1110 = vadd.f32 %v1109, %v1011
    %v1111 = vadd.f32 %v1110, %v1013
    %v1112 = vadd.f32 %v1111, %v1015
    %v1113 = vadd.f32 %v1112, %v1017
    %v1114 = vadd.f32 %v1113, %v1019
    %v1115 = vadd.f32 %v1114, %v1021
    %v1116 = vadd.f32 %v1115, %v1023
    %v1117 = vadd.f32 %v1116, %v1025
    %v1118 = vadd.f32 %v1117, %v1027
    %v1119 = vadd.f32 %v1118, %v1029
    %v1120 = vadd.f32 %v1119, %v1031
    %v1121 = vadd.f32 %v1120, %v1033
    %v1122 = vadd.f32 %v1121, %v1035
    %v1123 = vadd.f32 %v1122, %v1037
    %v1124 = vadd.f32 %v1123, %v1039
    %v1125 = vadd.f32 %v1124, %v1041
    %v1126 = vadd.f32 %v1125, %v1043
    %v1127 = vadd.f32 %v1126, %v1045
    %v1128 = vadd.f32 %v1127, %v1047
    %v1129 = vadd.f32 %v1128, %v1049
    %v1130 = vadd.f32 %v1129, %v1051
    %v1131 = vadd.f32 %v1130, %v1053
    %v1132 = vadd.f32 %v1131, %v1055
    %v1133 = vadd.f32 %v1132, %v1057
    %v1134 = vadd.f32 %v1133, %v1059
    %v1135 = vadd.f32 %v1134, %v1061
    %v1136 = vadd.f32 %v1135, %v1063
    %v1137 = vadd.f32 %v1136, %v1065
    %v1138 = vadd.f32 %v1137, %v1067
    %v1139 = vadd.f32 %v1138, %v1069
    %v1140 = vadd.f32 %v1139, %v1071
    %v1141 = vadd.f32 %v1140, %v1073
    %v1142 = vadd.f32 %v1141, %v1075
    %v1143 = vadd.f32 %v1142, %v1077
    %v1144 = vadd.f32 %v1143, %v1079
    %v1145 = vadd.f32 %v1144, %v1081
    %v1146 = vadd.f32 %v1145, %v1083
    %v1147 = vadd.f32 %v1146, %v1085
    %v1148 = vadd.f32 %v1147, %v1087
    %v1149 = vadd.f32 %v1148, %v1089
    %v1150 = vadd.f32 %v1149, %v1091
    %v1151 = vadd.f32 %v1150, %v1093
    %v1152 = vadd.f32 %v1151, %v1095
    %v1153 = vadd.f32 %v1152, %v1097
    %v1154 = vadd.f32 %v1153, %v1099
    %v1155 = vadd.f32 %v931, %v1154
    %v1156 = vld [vmem:[#allocation2 + $0x8c0] sm:$0xff]
    %v1157 = vld [vmem:[#allocation2 + $0x8c8] sm:$0xff]
    %v1158 = vld [vmem:[#allocation2 + $0x8d0] sm:$0xff]
    %v1159 = vld [vmem:[#allocation2 + $0x8d8] sm:$0xff]
    %v1160 = vld [vmem:[#allocation2 + $0x8e0] sm:$0xff]
    %v1161 = vld [vmem:[#allocation2 + $0x8e8] sm:$0xff]
    %v1162 = vld [vmem:[#allocation2 + $0x8f0] sm:$0xff]
    %v1163 = vld [vmem:[#allocation2 + $0x8f8] sm:$0xff]
    %v1164 = vld [vmem:[#allocation2 + $0x900] sm:$0xff]
    %v1165 = vld [vmem:[#allocation2 + $0x908] sm:$0xff]
    %v1166 = vld [vmem:[#allocation2 + $0x910] sm:$0xff]
    %v1167 = vld [vmem:[#allocation2 + $0x918] sm:$0xff]
    %v1168 = vld [vmem:[#allocation2 + $0x920] sm:$0xff]
    %v1169 = vld [vmem:[#allocation2 + $0x928] sm:$0xff]
    %v1170 = vld [vmem:[#allocation2 + $0x930] sm:$0xff]
    %v1171 = vld [vmem:[#allocation2 + $0x938] sm:$0xff]
    %v1172 = vld [vmem:[#allocation2 + $0x940] sm:$0xff]
    %v1173 = vld [vmem:[#allocation2 + $0x948] sm:$0xff]
    %v1174 = vld [vmem:[#allocation2 + $0x950] sm:$0xff]
    %v1175 = vld [vmem:[#allocation2 + $0x958] sm:$0xff]
    %v1176 = vld [vmem:[#allocation2 + $0x960] sm:$0xff]
    %v1177 = vld [vmem:[#allocation2 + $0x968] sm:$0xff]
    %v1178 = vld [vmem:[#allocation2 + $0x970] sm:$0xff]
    %v1179 = vld [vmem:[#allocation2 + $0x978] sm:$0xff]
    %v1180 = vld [vmem:[#allocation2 + $0x980] sm:$0xff]
    %v1181 = vld [vmem:[#allocation2 + $0x988] sm:$0xff]
    %v1182 = vld [vmem:[#allocation2 + $0x990] sm:$0xff]
    %v1183 = vld [vmem:[#allocation2 + $0x998] sm:$0xff]
    %v1184 = vld [vmem:[#allocation2 + $0x9a0] sm:$0xff]
    %v1185 = vld [vmem:[#allocation2 + $0x9a8] sm:$0xff]
    %v1186 = vld [vmem:[#allocation2 + $0x9b0] sm:$0xff]
    %v1187 = vld [vmem:[#allocation2 + $0x9b8] sm:$0xff]
    %v1188 = vld [vmem:[#allocation2 + $0x9c0] sm:$0xff]
    %v1189 = vld [vmem:[#allocation2 + $0x9c8] sm:$0xff]
    %v1190 = vld [vmem:[#allocation2 + $0x9d0] sm:$0xff]
    %v1191 = vld [vmem:[#allocation2 + $0x9d8] sm:$0xff]
    %v1192 = vld [vmem:[#allocation2 + $0x9e0] sm:$0xff]
    %v1193 = vld [vmem:[#allocation2 + $0x9e8] sm:$0xff]
    %v1194 = vld [vmem:[#allocation2 + $0x9f0] sm:$0xff]
    %v1195 = vld [vmem:[#allocation2 + $0x9f8] sm:$0xff]
    %v1196 = vld [vmem:[#allocation2 + $0xa00] sm:$0xff]
    %v1197 = vld [vmem:[#allocation2 + $0xa08] sm:$0xff]
    %v1198 = vld [vmem:[#allocation2 + $0xa10] sm:$0xff]
    %v1199 = vld [vmem:[#allocation2 + $0xa18] sm:$0xff]
    %v1200 = vld [vmem:[#allocation2 + $0xa20] sm:$0xff]
    %v1201 = vld [vmem:[#allocation2 + $0xa28] sm:$0xff]
    %v1202 = vld [vmem:[#allocation2 + $0xa30] sm:$0xff]
    %v1203 = vld [vmem:[#allocation2 + $0xa38] sm:$0xff]
    %v1204 = vld [vmem:[#allocation2 + $0xa40] sm:$0xff]
    %v1205 = vld [vmem:[#allocation2 + $0xa48] sm:$0xff]
    %v1206 = vld [vmem:[#allocation2 + $0xa50] sm:$0xff]
    %v1207 = vld [vmem:[#allocation2 + $0xa58] sm:$0xff]
    %v1208 = vld [vmem:[#allocation2 + $0xa60] sm:$0xff]
    %v1209 = vld [vmem:[#allocation2 + $0xa68] sm:$0xff]
    %v1210 = vld [vmem:[#allocation2 + $0xa70] sm:$0xff]
    %v1211 = vld [vmem:[#allocation2 + $0xa78] sm:$0xff]
    %v1212 = vlog2.pop %v1156
    %v1213 = vmul.f32 %v1212, 0.6931472
    %v1214 = vlog2.pop %v1157
    %v1215 = vmul.f32 %v1214, 0.6931472
    %v1216 = vlog2.pop %v1158
    %v1217 = vmul.f32 %v1216, 0.6931472
    %v1218 = vlog2.pop %v1159
    %v1219 = vmul.f32 %v1218, 0.6931472
    %v1220 = vlog2.pop %v1160
    %v1221 = vmul.f32 %v1220, 0.6931472
    %v1222 = vlog2.pop %v1161
    %v1223 = vmul.f32 %v1222, 0.6931472
    %v1224 = vlog2.pop %v1162
    %v1225 = vmul.f32 %v1224, 0.6931472
    %v1226 = vlog2.pop %v1163
    %v1227 = vmul.f32 %v1226, 0.6931472
    %v1228 = vlog2.pop %v1164
    %v1229 = vmul.f32 %v1228, 0.6931472
    %v1230 = vlog2.pop %v1165
    %v1231 = vmul.f32 %v1230, 0.6931472
    %v1232 = vlog2.pop %v1166
    %v1233 = vmul.f32 %v1232, 0.6931472
    %v1234 = vlog2.pop %v1167
    %v1235 = vmul.f32 %v1234, 0.6931472
    %v1236 = vlog2.pop %v1168
    %v1237 = vmul.f32 %v1236, 0.6931472
    %v1238 = vlog2.pop %v1169
    %v1239 = vmul.f32 %v1238, 0.6931472
    %v1240 = vlog2.pop %v1170
    %v1241 = vmul.f32 %v1240, 0.6931472
    %v1242 = vlog2.pop %v1171
    %v1243 = vmul.f32 %v1242, 0.6931472
    %v1244 = vlog2.pop %v1172
    %v1245 = vmul.f32 %v1244, 0.6931472
    %v1246 = vlog2.pop %v1173
    %v1247 = vmul.f32 %v1246, 0.6931472
    %v1248 = vlog2.pop %v1174
    %v1249 = vmul.f32 %v1248, 0.6931472
    %v1250 = vlog2.pop %v1175
    %v1251 = vmul.f32 %v1250, 0.6931472
    %v1252 = vlog2.pop %v1176
    %v1253 = vmul.f32 %v1252, 0.6931472
    %v1254 = vlog2.pop %v1177
    %v1255 = vmul.f32 %v1254, 0.6931472
    %v1256 = vlog2.pop %v1178
    %v1257 = vmul.f32 %v1256, 0.6931472
    %v1258 = vlog2.pop %v1179
    %v1259 = vmul.f32 %v1258, 0.6931472
    %v1260 = vlog2.pop %v1180
    %v1261 = vmul.f32 %v1260, 0.6931472
    %v1262 = vlog2.pop %v1181
    %v1263 = vmul.f32 %v1262, 0.6931472
    %v1264 = vlog2.pop %v1182
    %v1265 = vmul.f32 %v1264, 0.6931472
    %v1266 = vlog2.pop %v1183
    %v1267 = vmul.f32 %v1266, 0.6931472
    %v1268 = vlog2.pop %v1184
    %v1269 = vmul.f32 %v1268, 0.6931472
    %v1270 = vlog2.pop %v1185
    %v1271 = vmul.f32 %v1270, 0.6931472
    %v1272 = vlog2.pop %v1186
    %v1273 = vmul.f32 %v1272, 0.6931472
    %v1274 = vlog2.pop %v1187
    %v1275 = vmul.f32 %v1274, 0.6931472
    %v1276 = vlog2.pop %v1188
    %v1277 = vmul.f32 %v1276, 0.6931472
    %v1278 = vlog2.pop %v1189
    %v1279 = vmul.f32 %v1278, 0.6931472
    %v1280 = vlog2.pop %v1190
    %v1281 = vmul.f32 %v1280, 0.6931472
    %v1282 = vlog2.pop %v1191
    %v1283 = vmul.f32 %v1282, 0.6931472
    %v1284 = vlog2.pop %v1192
    %v1285 = vmul.f32 %v1284, 0.6931472
    %v1286 = vlog2.pop %v1193
    %v1287 = vmul.f32 %v1286, 0.6931472
    %v1288 = vlog2.pop %v1194
    %v1289 = vmul.f32 %v1288, 0.6931472
    %v1290 = vlog2.pop %v1195
    %v1291 = vmul.f32 %v1290, 0.6931472
    %v1292 = vlog2.pop %v1196
    %v1293 = vmul.f32 %v1292, 0.6931472
    %v1294 = vlog2.pop %v1197
    %v1295 = vmul.f32 %v1294, 0.6931472
    %v1296 = vlog2.pop %v1198
    %v1297 = vmul.f32 %v1296, 0.6931472
    %v1298 = vlog2.pop %v1199
    %v1299 = vmul.f32 %v1298, 0.6931472
    %v1300 = vlog2.pop %v1200
    %v1301 = vmul.f32 %v1300, 0.6931472
    %v1302 = vlog2.pop %v1201
    %v1303 = vmul.f32 %v1302, 0.6931472
    %v1304 = vlog2.pop %v1202
    %v1305 = vmul.f32 %v1304, 0.6931472
    %v1306 = vlog2.pop %v1203
    %v1307 = vmul.f32 %v1306, 0.6931472
    %v1308 = vlog2.pop %v1204
    %v1309 = vmul.f32 %v1308, 0.6931472
    %v1310 = vlog2.pop %v1205
    %v1311 = vmul.f32 %v1310, 0.6931472
    %v1312 = vlog2.pop %v1206
    %v1313 = vmul.f32 %v1312, 0.6931472
    %v1314 = vlog2.pop %v1207
    %v1315 = vmul.f32 %v1314, 0.6931472
    %v1316 = vlog2.pop %v1208
    %v1317 = vmul.f32 %v1316, 0.6931472
    %v1318 = vlog2.pop %v1209
    %v1319 = vmul.f32 %v1318, 0.6931472
    %v1320 = vlog2.pop %v1210
    %v1321 = vmul.f32 %v1320, 0.6931472
    %v1322 = vlog2.pop %v1211
    %v1323 = vmul.f32 %v1322, 0.6931472
    %v1324 = vadd.f32 %v1213, %v1215
    %v1325 = vadd.f32 %v1324, %v1217
    %v1326 = vadd.f32 %v1325, %v1219
    %v1327 = vadd.f32 %v1326, %v1221
    %v1328 = vadd.f32 %v1327, %v1223
    %v1329 = vadd.f32 %v1328, %v1225
    %v1330 = vadd.f32 %v1329, %v1227
    %v1331 = vadd.f32 %v1330, %v1229
    %v1332 = vadd.f32 %v1331, %v1231
    %v1333 = vadd.f32 %v1332, %v1233
    %v1334 = vadd.f32 %v1333, %v1235
    %v1335 = vadd.f32 %v1334, %v1237
    %v1336 = vadd.f32 %v1335, %v1239
    %v1337 = vadd.f32 %v1336, %v1241
    %v1338 = vadd.f32 %v1337, %v1243
    %v1339 = vadd.f32 %v1338, %v1245
    %v1340 = vadd.f32 %v1339, %v1247
    %v1341 = vadd.f32 %v1340, %v1249
    %v1342 = vadd.f32 %v1341, %v1251
    %v1343 = vadd.f32 %v1342, %v1253
    %v1344 = vadd.f32 %v1343, %v1255
    %v1345 = vadd.f32 %v1344, %v1257
    %v1346 = vadd.f32 %v1345, %v1259
    %v1347 = vadd.f32 %v1346, %v1261
    %v1348 = vadd.f32 %v1347, %v1263
    %v1349 = vadd.f32 %v1348, %v1265
    %v1350 = vadd.f32 %v1349, %v1267
    %v1351 = vadd.f32 %v1350, %v1269
    %v1352 = vadd.f32 %v1351, %v1271
    %v1353 = vadd.f32 %v1352, %v1273
    %v1354 = vadd.f32 %v1353, %v1275
    %v1355 = vadd.f32 %v1354, %v1277
    %v1356 = vadd.f32 %v1355, %v1279
    %v1357 = vadd.f32 %v1356, %v1281
    %v1358 = vadd.f32 %v1357, %v1283
    %v1359 = vadd.f32 %v1358, %v1285
    %v1360 = vadd.f32 %v1359, %v1287
    %v1361 = vadd.f32 %v1360, %v1289
    %v1362 = vadd.f32 %v1361, %v1291
    %v1363 = vadd.f32 %v1362, %v1293
    %v1364 = vadd.f32 %v1363, %v1295
    %v1365 = vadd.f32 %v1364, %v1297
    %v1366 = vadd.f32 %v1365, %v1299
    %v1367 = vadd.f32 %v1366, %v1301
    %v1368 = vadd.f32 %v1367, %v1303
    %v1369 = vadd.f32 %v1368, %v1305
    %v1370 = vadd.f32 %v1369, %v1307
    %v1371 = vadd.f32 %v1370, %v1309
    %v1372 = vadd.f32 %v1371, %v1311
    %v1373 = vadd.f32 %v1372, %v1313
    %v1374 = vadd.f32 %v1373, %v1315
    %v1375 = vadd.f32 %v1374, %v1317
    %v1376 = vadd.f32 %v1375, %v1319
    %v1377 = vadd.f32 %v1376, %v1321
    %v1378 = vadd.f32 %v1377, %v1323
    %v1379 = vadd.f32 %v1155, %v1378
    %v1380 = vld [vmem:[#allocation2 + $0xa80] sm:$0xff]
    %v1381 = vld [vmem:[#allocation2 + $0xa88] sm:$0xff]
    %v1382 = vld [vmem:[#allocation2 + $0xa90] sm:$0xff]
    %v1383 = vld [vmem:[#allocation2 + $0xa98] sm:$0xff]
    %v1384 = vld [vmem:[#allocation2 + $0xaa0] sm:$0xff]
    %v1385 = vld [vmem:[#allocation2 + $0xaa8] sm:$0xff]
    %v1386 = vld [vmem:[#allocation2 + $0xab0] sm:$0xff]
    %v1387 = vld [vmem:[#allocation2 + $0xab8] sm:$0xff]
    %v1388 = vld [vmem:[#allocation2 + $0xac0] sm:$0xff]
    %v1389 = vld [vmem:[#allocation2 + $0xac8] sm:$0xff]
    %v1390 = vld [vmem:[#allocation2 + $0xad0] sm:$0xff]
    %v1391 = vld [vmem:[#allocation2 + $0xad8] sm:$0xff]
    %v1392 = vld [vmem:[#allocation2 + $0xae0] sm:$0xff]
    %v1393 = vld [vmem:[#allocation2 + $0xae8] sm:$0xff]
    %v1394 = vld [vmem:[#allocation2 + $0xaf0] sm:$0xff]
    %v1395 = vld [vmem:[#allocation2 + $0xaf8] sm:$0xff]
    %v1396 = vld [vmem:[#allocation2 + $0xb00] sm:$0xff]
    %v1397 = vld [vmem:[#allocation2 + $0xb08] sm:$0xff]
    %v1398 = vld [vmem:[#allocation2 + $0xb10] sm:$0xff]
    %v1399 = vld [vmem:[#allocation2 + $0xb18] sm:$0xff]
    %v1400 = vld [vmem:[#allocation2 + $0xb20] sm:$0xff]
    %v1401 = vld [vmem:[#allocation2 + $0xb28] sm:$0xff]
    %v1402 = vld [vmem:[#allocation2 + $0xb30] sm:$0xff]
    %v1403 = vld [vmem:[#allocation2 + $0xb38] sm:$0xff]
    %v1404 = vld [vmem:[#allocation2 + $0xb40] sm:$0xff]
    %v1405 = vld [vmem:[#allocation2 + $0xb48] sm:$0xff]
    %v1406 = vld [vmem:[#allocation2 + $0xb50] sm:$0xff]
    %v1407 = vld [vmem:[#allocation2 + $0xb58] sm:$0xff]
    %v1408 = vld [vmem:[#allocation2 + $0xb60] sm:$0xff]
    %v1409 = vld [vmem:[#allocation2 + $0xb68] sm:$0xff]
    %v1410 = vld [vmem:[#allocation2 + $0xb70] sm:$0xff]
    %v1411 = vld [vmem:[#allocation2 + $0xb78] sm:$0xff]
    %v1412 = vld [vmem:[#allocation2 + $0xb80] sm:$0xff]
    %v1413 = vld [vmem:[#allocation2 + $0xb88] sm:$0xff]
    %v1414 = vld [vmem:[#allocation2 + $0xb90] sm:$0xff]
    %v1415 = vld [vmem:[#allocation2 + $0xb98] sm:$0xff]
    %v1416 = vld [vmem:[#allocation2 + $0xba0] sm:$0xff]
    %v1417 = vld [vmem:[#allocation2 + $0xba8] sm:$0xff]
    %v1418 = vld [vmem:[#allocation2 + $0xbb0] sm:$0xff]
    %v1419 = vld [vmem:[#allocation2 + $0xbb8] sm:$0xff]
    %v1420 = vld [vmem:[#allocation2 + $0xbc0] sm:$0xff]
    %v1421 = vld [vmem:[#allocation2 + $0xbc8] sm:$0xff]
    %v1422 = vld [vmem:[#allocation2 + $0xbd0] sm:$0xff]
    %v1423 = vld [vmem:[#allocation2 + $0xbd8] sm:$0xff]
    %v1424 = vld [vmem:[#allocation2 + $0xbe0] sm:$0xff]
    %v1425 = vld [vmem:[#allocation2 + $0xbe8] sm:$0xff]
    %v1426 = vld [vmem:[#allocation2 + $0xbf0] sm:$0xff]
    %v1427 = vld [vmem:[#allocation2 + $0xbf8] sm:$0xff]
    %v1428 = vld [vmem:[#allocation2 + $0xc00] sm:$0xff]
    %v1429 = vld [vmem:[#allocation2 + $0xc08] sm:$0xff]
    %v1430 = vld [vmem:[#allocation2 + $0xc10] sm:$0xff]
    %v1431 = vld [vmem:[#allocation2 + $0xc18] sm:$0xff]
    %v1432 = vld [vmem:[#allocation2 + $0xc20] sm:$0xff]
    %v1433 = vld [vmem:[#allocation2 + $0xc28] sm:$0xff]
    %v1434 = vld [vmem:[#allocation2 + $0xc30] sm:$0xff]
    %v1435 = vld [vmem:[#allocation2 + $0xc38] sm:$0xff]
    %v1436 = vlog2.pop %v1380
    %v1437 = vmul.f32 %v1436, 0.6931472
    %v1438 = vlog2.pop %v1381
    %v1439 = vmul.f32 %v1438, 0.6931472
    %v1440 = vlog2.pop %v1382
    %v1441 = vmul.f32 %v1440, 0.6931472
    %v1442 = vlog2.pop %v1383
    %v1443 = vmul.f32 %v1442, 0.6931472
    %v1444 = vlog2.pop %v1384
    %v1445 = vmul.f32 %v1444, 0.6931472
    %v1446 = vlog2.pop %v1385
    %v1447 = vmul.f32 %v1446, 0.6931472
    %v1448 = vlog2.pop %v1386
    %v1449 = vmul.f32 %v1448, 0.6931472
    %v1450 = vlog2.pop %v1387
    %v1451 = vmul.f32 %v1450, 0.6931472
    %v1452 = vlog2.pop %v1388
    %v1453 = vmul.f32 %v1452, 0.6931472
    %v1454 = vlog2.pop %v1389
    %v1455 = vmul.f32 %v1454, 0.6931472
    %v1456 = vlog2.pop %v1390
    %v1457 = vmul.f32 %v1456, 0.6931472
    %v1458 = vlog2.pop %v1391
    %v1459 = vmul.f32 %v1458, 0.6931472
    %v1460 = vlog2.pop %v1392
    %v1461 = vmul.f32 %v1460, 0.6931472
    %v1462 = vlog2.pop %v1393
    %v1463 = vmul.f32 %v1462, 0.6931472
    %v1464 = vlog2.pop %v1394
    %v1465 = vmul.f32 %v1464, 0.6931472
    %v1466 = vlog2.pop %v1395
    %v1467 = vmul.f32 %v1466, 0.6931472
    %v1468 = vlog2.pop %v1396
    %v1469 = vmul.f32 %v1468, 0.6931472
    %v1470 = vlog2.pop %v1397
    %v1471 = vmul.f32 %v1470, 0.6931472
    %v1472 = vlog2.pop %v1398
    %v1473 = vmul.f32 %v1472, 0.6931472
    %v1474 = vlog2.pop %v1399
    %v1475 = vmul.f32 %v1474, 0.6931472
    %v1476 = vlog2.pop %v1400
    %v1477 = vmul.f32 %v1476, 0.6931472
    %v1478 = vlog2.pop %v1401
    %v1479 = vmul.f32 %v1478, 0.6931472
    %v1480 = vlog2.pop %v1402
    %v1481 = vmul.f32 %v1480, 0.6931472
    %v1482 = vlog2.pop %v1403
    %v1483 = vmul.f32 %v1482, 0.6931472
    %v1484 = vlog2.pop %v1404
    %v1485 = vmul.f32 %v1484, 0.6931472
    %v1486 = vlog2.pop %v1405
    %v1487 = vmul.f32 %v1486, 0.6931472
    %v1488 = vlog2.pop %v1406
    %v1489 = vmul.f32 %v1488, 0.6931472
    %v1490 = vlog2.pop %v1407
    %v1491 = vmul.f32 %v1490, 0.6931472
    %v1492 = vlog2.pop %v1408
    %v1493 = vmul.f32 %v1492, 0.6931472
    %v1494 = vlog2.pop %v1409
    %v1495 = vmul.f32 %v1494, 0.6931472
    %v1496 = vlog2.pop %v1410
    %v1497 = vmul.f32 %v1496, 0.6931472
    %v1498 = vlog2.pop %v1411
    %v1499 = vmul.f32 %v1498, 0.6931472
    %v1500 = vlog2.pop %v1412
    %v1501 = vmul.f32 %v1500, 0.6931472
    %v1502 = vlog2.pop %v1413
    %v1503 = vmul.f32 %v1502, 0.6931472
    %v1504 = vlog2.pop %v1414
    %v1505 = vmul.f32 %v1504, 0.6931472
    %v1506 = vlog2.pop %v1415
    %v1507 = vmul.f32 %v1506, 0.6931472
    %v1508 = vlog2.pop %v1416
    %v1509 = vmul.f32 %v1508, 0.6931472
    %v1510 = vlog2.pop %v1417
    %v1511 = vmul.f32 %v1510, 0.6931472
    %v1512 = vlog2.pop %v1418
    %v1513 = vmul.f32 %v1512, 0.6931472
    %v1514 = vlog2.pop %v1419
    %v1515 = vmul.f32 %v1514, 0.6931472
    %v1516 = vlog2.pop %v1420
    %v1517 = vmul.f32 %v1516, 0.6931472
    %v1518 = vlog2.pop %v1421
    %v1519 = vmul.f32 %v1518, 0.6931472
    %v1520 = vlog2.pop %v1422
    %v1521 = vmul.f32 %v1520, 0.6931472
    %v1522 = vlog2.pop %v1423
    %v1523 = vmul.f32 %v1522, 0.6931472
    %v1524 = vlog2.pop %v1424
    %v1525 = vmul.f32 %v1524, 0.6931472
    %v1526 = vlog2.pop %v1425
    %v1527 = vmul.f32 %v1526, 0.6931472
    %v1528 = vlog2.pop %v1426
    %v1529 = vmul.f32 %v1528, 0.6931472
    %v1530 = vlog2.pop %v1427
    %v1531 = vmul.f32 %v1530, 0.6931472
    %v1532 = vlog2.pop %v1428
    %v1533 = vmul.f32 %v1532, 0.6931472
    %v1534 = vlog2.pop %v1429
    %v1535 = vmul.f32 %v1534, 0.6931472
    %v1536 = vlog2.pop %v1430
    %v1537 = vmul.f32 %v1536, 0.6931472
    %v1538 = vlog2.pop %v1431
    %v1539 = vmul.f32 %v1538, 0.6931472
    %v1540 = vlog2.pop %v1432
    %v1541 = vmul.f32 %v1540, 0.6931472
    %v1542 = vlog2.pop %v1433
    %v1543 = vmul.f32 %v1542, 0.6931472
    %v1544 = vlog2.pop %v1434
    %v1545 = vmul.f32 %v1544, 0.6931472
    %v1546 = vlog2.pop %v1435
    %v1547 = vmul.f32 %v1546, 0.6931472
    %v1548 = vadd.f32 %v1437, %v1439
    %v1549 = vadd.f32 %v1548, %v1441
    %v1550 = vadd.f32 %v1549, %v1443
    %v1551 = vadd.f32 %v1550, %v1445
    %v1552 = vadd.f32 %v1551, %v1447
    %v1553 = vadd.f32 %v1552, %v1449
    %v1554 = vadd.f32 %v1553, %v1451
    %v1555 = vadd.f32 %v1554, %v1453
    %v1556 = vadd.f32 %v1555, %v1455
    %v1557 = vadd.f32 %v1556, %v1457
    %v1558 = vadd.f32 %v1557, %v1459
    %v1559 = vadd.f32 %v1558, %v1461
    %v1560 = vadd.f32 %v1559, %v1463
    %v1561 = vadd.f32 %v1560, %v1465
    %v1562 = vadd.f32 %v1561, %v1467
    %v1563 = vadd.f32 %v1562, %v1469
    %v1564 = vadd.f32 %v1563, %v1471
    %v1565 = vadd.f32 %v1564, %v1473
    %v1566 = vadd.f32 %v1565, %v1475
    %v1567 = vadd.f32 %v1566, %v1477
    %v1568 = vadd.f32 %v1567, %v1479
    %v1569 = vadd.f32 %v1568, %v1481
    %v1570 = vadd.f32 %v1569, %v1483
    %v1571 = vadd.f32 %v1570, %v1485
    %v1572 = vadd.f32 %v1571, %v1487
    %v1573 = vadd.f32 %v1572, %v1489
    %v1574 = vadd.f32 %v1573, %v1491
    %v1575 = vadd.f32 %v1574, %v1493
    %v1576 = vadd.f32 %v1575, %v1495
    %v1577 = vadd.f32 %v1576, %v1497
    %v1578 = vadd.f32 %v1577, %v1499
    %v1579 = vadd.f32 %v1578, %v1501
    %v1580 = vadd.f32 %v1579, %v1503
    %v1581 = vadd.f32 %v1580, %v1505
    %v1582 = vadd.f32 %v1581, %v1507
    %v1583 = vadd.f32 %v1582, %v1509
    %v1584 = vadd.f32 %v1583, %v1511
    %v1585 = vadd.f32 %v1584, %v1513
    %v1586 = vadd.f32 %v1585, %v1515
    %v1587 = vadd.f32 %v1586, %v1517
    %v1588 = vadd.f32 %v1587, %v1519
    %v1589 = vadd.f32 %v1588, %v1521
    %v1590 = vadd.f32 %v1589, %v1523
    %v1591 = vadd.f32 %v1590, %v1525
    %v1592 = vadd.f32 %v1591, %v1527
    %v1593 = vadd.f32 %v1592, %v1529
    %v1594 = vadd.f32 %v1593, %v1531
    %v1595 = vadd.f32 %v1594, %v1533
    %v1596 = vadd.f32 %v1595, %v1535
    %v1597 = vadd.f32 %v1596, %v1537
    %v1598 = vadd.f32 %v1597, %v1539
    %v1599 = vadd.f32 %v1598, %v1541
    %v1600 = vadd.f32 %v1599, %v1543
    %v1601 = vadd.f32 %v1600, %v1545
    %v1602 = vadd.f32 %v1601, %v1547
    %v1603 = vadd.f32 %v1379, %v1602
    %v1604 = vld [vmem:[#allocation5] sm:$0xff]
    %v1605 = vadd.f32 %v1604, %v1603
    %1606 = vst [vmem:[#allocation5] sm:$0xff] %v1605
    // Predicated region
    $region14: #{tpu_custom_call.1} parent=1 // pred_check
      _
    $region15: #{tpu_custom_call.1} parent=1 // pred_check_branch
      %1608 = sbr.rel (0) target = $region17
    $region16: #{tpu_custom_call.1} parent=1 // pred_region
      %1610 = vsyncadd [#allocation4], 0
      %s1612 = sshll.u32 [#allocation5], 4
      %s1613 = int_to_ptr.vmem [resolvable:$true] %s1612
      %s1614 = sshll.u32 %s1, 4
      %s1615 = int_to_ptr.hbm [resolvable:$true] %s1614
      %1617 = dma.vmem_to_hbm [thread:$0]  %s1613, 128, %s1615, [#allocation4]
    $region17: #{tpu_custom_call.1} parent=1 // pred_fallthru
      _
    // Predicated region
    $region18: #{tpu_custom_call.1} parent=1 // pred_check
      _
    $region19: #{tpu_custom_call.1} parent=1 // pred_check_branch
      %1619 = sbr.rel (0) target = $region21
    $region20: #{tpu_custom_call.1} parent=1 // pred_region
      %1621 = dma.done [#allocation4], 128
    $region21: #{tpu_custom_call.1} parent=1 // pred_fallthru
      _
    %1622 = vsyncpa [#allocation3], 1
    %1623 = vsyncpa [#allocation4], 1

</llo_original>
